<compile_context>
chip_gen: v7x
topology: tpu7x:2x2x1
jax: 0.10.0
libtpu: 0.0.40
codegen_flags: <defaults>
</compile_context>

<pallas_src>
import functools

import jax
import jax.numpy as jnp
import numpy as np
from jax.experimental import pallas as pl
from jax.experimental.pallas import tpu as pltpu


# ----------------------------------------------------------------------------
# pltpu.roll rotation-direction probe (runs once at import, outside jit).
# We need "bring lane block k down to lanes [0, H)"; whether that is shift=k*H
# or shift=(4-k)*H depends on the rotate convention, so resolve it on-device.
# ----------------------------------------------------------------------------
def _roll_matches_np_roll() -> bool:
    def probe(o_ref):
        o_ref[...] = pltpu.roll(
            jax.lax.broadcasted_iota(jnp.int32, (8, 128), 1), 1, 1)

    out = pl.pallas_call(
        probe, out_shape=jax.ShapeDtypeStruct((8, 128), jnp.int32))()
    # np.roll semantics: out[0, 0] == 127 ; opposite convention: out[0, 0] == 1
    return int(jax.device_get(out)[0, 0]) == 127


try:
    _ROLL_MATCHES_NP = _roll_matches_np_roll()
except Exception:  # fall back to documented np.roll-compatible semantics
    _ROLL_MATCHES_NP = True


# ----------------------------------------------------------------------------
# Fused network kernel: all LSTM layers + Linear in one invocation.
# PyTorch gate order in the packed weights is (i, f, g, o).
# ----------------------------------------------------------------------------
def _net_kernel(*refs, num_layers, f_shift, g_shift, o_shift):
    """refs layout:
      inputs : x (B,T,I), h0 (L,B,H), c0 (L,B,H),
               [wih_t (K_l,4H), whh_t (H,4H), b (1,4H)] * L,
               w_lin_t (H,O), b_lin (1,O)
      outputs: y (B,T,O), h_n (L,B,H), c_n (L,B,H)
      scratch: g_scr (T*B,4H) f32, seq_scr (T*B,H) f32   (time-major rows)
    """
    n_in = 3 + 3 * num_layers + 2
    x_ref, h0_ref, c0_ref = refs[:3]
    layer_refs = refs[3:3 + 3 * num_layers]
    wlin_ref, blin_ref = refs[n_in - 2], refs[n_in - 1]
    y_ref, hn_ref, cn_ref = refs[n_in:n_in + 3]
    g_scr, seq_scr = refs[n_in + 3:]

    B, T, _ = x_ref.shape
    H = h0_ref.shape[-1]

    # Layer-0 input re-ordered time-major once (off the recurrence path).
    x_val = x_ref[...]                                        # (B, T, I)
    x_tm = jnp.concatenate([x_val[:, t, :] for t in range(T)], axis=0)  # (T*B, I)

    for l in range(num_layers):
        wih_ref = layer_refs[3 * l + 0]
        whh_ref = layer_refs[3 * l + 1]
        b_ref = layer_refs[3 * l + 2]

        inp = x_tm if l == 0 else seq_scr[...]                # (T*B, K_l)

        # Hoisted input projection: ONE matmul covering every time step,
        # stored time-major so the loop below reads clean (B, 4H) tiles.
        g_scr[...] = (jnp.dot(inp, wih_ref[...],
                              preferred_element_type=jnp.float32)
                      + b_ref[...])                           # (T*B, 4H)

        # W_hh is loop-invariant; Mosaic hoists the weight staging. Explicit
        # pltpu.matmul_push_rhs residency was considered but not used (risk).
        whh = whh_ref[...]                                    # (H, 4H)
        h = h0_ref[l]                                         # (B, H)
        # Cell state kept full lane width (B, 4H); only lanes [0, H) are
        # meaningful, the remaining lanes stay bounded (gate-activation
        # products) and never reach the outputs.
        c = jnp.concatenate(
            [c0_ref[l], jnp.zeros((B, 3 * H), jnp.float32)], axis=-1)

        # Statically unrolled recurrence: only h_{t-1} @ W_hh^T is sequential.
        for t in range(T):
            r0 = t * B
            gates = g_scr[r0:r0 + B, :] + jnp.dot(
                h, whh, preferred_element_type=jnp.float32)   # (B, 4H)
            sg = jax.nn.sigmoid(gates)      # i, f, o : one full-width EUP pass
            tg = jnp.tanh(gates)            # g       : one full-width EUP pass
            # Align f/g/o onto lanes [0, H) with XLU rotations; i is already
            # there.  No sub-vreg lane slices on the serial path.
            fg = pltpu.roll(sg, f_shift, 1)
            gg = pltpu.roll(tg, g_shift, 1)
            og = pltpu.roll(sg, o_shift, 1)
            c = fg * c + sg * gg                              # valid lanes [0,H)
            h_full = og * jnp.tanh(c)
            h = h_full[:, :H]                                 # offset-0 slice
            seq_scr[r0:r0 + B, :] = h                         # direct VMEM store

        hn_ref[l] = h                                         # once per layer
        cn_ref[l] = c[:, :H]
        # TODO(synk): inter-layer dropout (PyTorch train-mode only) omitted;
        # config.dropout_rate treated as 0.0 (eval semantics).

    # Final Linear over all time steps in one matmul (time-major rows), then a
    # one-shot (B,T,O)=(2,8,4) batch-first epilogue write (off the serial path).
    y = (jnp.dot(seq_scr[...], wlin_ref[...],
                 preferred_element_type=jnp.float32) + blin_ref[...])  # (T*B, O)
    y_ref[...] = jnp.stack([y[t * B:(t + 1) * B, :] for t in range(T)], axis=1)


# ----------------------------------------------------------------------------
# Full Net forward: x (B, T, I) -> (linear_out (B, T, O), (h_n, c_n))
# ----------------------------------------------------------------------------
def net_forward(x_bti, params, hidden=None):
    B, T, _ = x_bti.shape
    L = len(params["lstm"])
    H = params["lstm"][0]["whh_t"].shape[0]
    O = params["lin"]["w_t"].shape[-1]
    if hidden is None:
        h0 = jnp.zeros((L, B, H), jnp.float32)
        c0 = jnp.zeros((L, B, H), jnp.float32)
    else:
        h0, c0 = hidden

    flat_w = []
    for layer in params["lstm"]:
        flat_w += [layer["wih_t"], layer["whh_t"], layer["b"]]

    if _ROLL_MATCHES_NP:            # roll(x, s)[j] == x[(j - s) % n]
        f_shift, g_shift, o_shift = 3 * H, 2 * H, H
    else:                           # opposite rotate convention
        f_shift, g_shift, o_shift = H, 2 * H, 3 * H

    kernel = functools.partial(_net_kernel, num_layers=L,
                               f_shift=f_shift, g_shift=g_shift,
                               o_shift=o_shift)

    n_in = 3 + 3 * L + 2
    vmem = functools.partial(pl.BlockSpec, memory_space=pltpu.MemorySpace.VMEM)

    # Grid-less single invocation: everything VMEM-resident; single TensorCore.
    # If batch grows, add a leading batch grid axis + dimension_semantics=
    # ("parallel",) so v7x's second core gets an independent batch shard.
    y, h_n, c_n = pl.pallas_call(
        kernel,
        out_shape=(jax.ShapeDtypeStruct((B, T, O), jnp.float32),
                   jax.ShapeDtypeStruct((L, B, H), jnp.float32),
                   jax.ShapeDtypeStruct((L, B, H), jnp.float32)),
        in_specs=[vmem() for _ in range(n_in)],
        out_specs=(vmem(), vmem(), vmem()),
        scratch_shapes=[pltpu.VMEM((T * B, 4 * H), jnp.float32),   # g_scr
                        pltpu.VMEM((T * B, H), jnp.float32)],      # seq_scr
    )(x_bti, h0, c0, *flat_w, params["lin"]["w_t"], params["lin"]["b"])
    return y, (h_n, c_n)


# ----------------------------------------------------------------------------
# Pure-JAX reference (lax.scan) for correctness check.
# ----------------------------------------------------------------------------
def ref_forward(x_bti, params, hidden=None):
    B, T, _ = x_bti.shape
    L = len(params["lstm"])
    H = params["lstm"][0]["whh_t"].shape[0]
    if hidden is None:
        h0 = jnp.zeros((L, B, H), jnp.float32)
        c0 = jnp.zeros((L, B, H), jnp.float32)
    else:
        h0, c0 = hidden

    def layer_ref(x_tbi, wih_t, whh_t, b, h0l, c0l):
        def step(carry, x_t):
            h, c = carry
            gates = x_t @ wih_t + h @ whh_t + b
            i, f, g, o = jnp.split(gates, 4, axis=-1)
            i = jax.nn.sigmoid(i)
            f = jax.nn.sigmoid(f)
            g = jnp.tanh(g)
            o = jax.nn.sigmoid(o)
            c = f * c + i * g
            h = o * jnp.tanh(c)
            return (h, c), h
        (hT, cT), ys = jax.lax.scan(step, (h0l, c0l), x_tbi)
        return ys, hT, cT

    x = jnp.transpose(x_bti, (1, 0, 2))
    hs, cs = [], []
    for l, layer in enumerate(params["lstm"]):
        x, hT, cT = layer_ref(x, layer["wih_t"], layer["whh_t"], layer["b"],
                              h0[l], c0[l])
        hs.append(hT)
        cs.append(cT)
    y = x.reshape(T * B, H) @ params["lin"]["w_t"] + params["lin"]["b"]
    y = y.reshape(T, B, -1).transpose(1, 0, 2)
    return y, (jnp.stack(hs), jnp.stack(cs))


# ----------------------------------------------------------------------------
# Deterministic parameter init (PyTorch-style uniform(-1/sqrt(H), 1/sqrt(H))).
# ----------------------------------------------------------------------------
def init_params(key, input_size, hidden_size, num_layers, output_size):
    params = {"lstm": [], "lin": {}}
    k = 1.0 / np.sqrt(hidden_size)
    for l in range(num_layers):
        in_sz = input_size if l == 0 else hidden_size
        key, k1, k2, k3, k4 = jax.random.split(key, 5)
        w_ih = jax.random.uniform(k1, (4 * hidden_size, in_sz), jnp.float32, -k, k)
        w_hh = jax.random.uniform(k2, (4 * hidden_size, hidden_size), jnp.float32, -k, k)
        b_ih = jax.random.uniform(k3, (4 * hidden_size,), jnp.float32, -k, k)
        b_hh = jax.random.uniform(k4, (4 * hidden_size,), jnp.float32, -k, k)
        params["lstm"].append({
            "wih_t": w_ih.T,                              # (in_sz, 4H)
            "whh_t": w_hh.T,                              # (H, 4H)
            "b": (b_ih + b_hh)[None, :],                  # (1, 4H)
        })
    key, k1, k2 = jax.random.split(key, 3)
    w = jax.random.uniform(k1, (output_size, hidden_size), jnp.float32, -k, k)
    b = jax.random.uniform(k2, (output_size,), jnp.float32, -k, k)
    params["lin"]["w_t"] = w.T                            # (H, O)
    params["lin"]["b"] = b[None, :]                       # (1, O)
    return params


if __name__ == "__main__":
    # config: input_size=16, hidden_size=32, lstm_layers=2,
    #         dropout_rate=0.0, output_size=4 ; batch=2, seq=8
    B, T, I, H, L, O = 2, 8, 16, 32, 2, 4

    key = jax.random.PRNGKey(0)
    key, kx, kp, kh, kc = jax.random.split(key, 5)
    x = jax.random.normal(kx, (B, T, I), jnp.float32)
    params = init_params(kp, I, H, L, O)

    fwd = jax.jit(net_forward)

    # hidden=None path
    y, (h_n, c_n) = fwd(x, params)
    jax.block_until_ready((y, h_n, c_n))
    y_ref, (h_ref, c_ref) = ref_forward(x, params)
    np.testing.assert_allclose(np.asarray(y), np.asarray(y_ref), rtol=1e-5, atol=1e-5)
    np.testing.assert_allclose(np.asarray(h_n), np.asarray(h_ref), rtol=1e-5, atol=1e-5)
    np.testing.assert_allclose(np.asarray(c_n), np.asarray(c_ref), rtol=1e-5, atol=1e-5)

    # explicit hidden-state path
    h0 = jax.random.normal(kh, (L, B, H), jnp.float32) * 0.1
    c0 = jax.random.normal(kc, (L, B, H), jnp.float32) * 0.1
    y2, (h2, c2) = fwd(x, params, (h0, c0))
    jax.block_until_ready((y2, h2, c2))
    y2r, (h2r, c2r) = ref_forward(x, params, (h0, c0))
    np.testing.assert_allclose(np.asarray(y2), np.asarray(y2r), rtol=1e-5, atol=1e-5)
    np.testing.assert_allclose(np.asarray(h2), np.asarray(h2r), rtol=1e-5, atol=1e-5)
    np.testing.assert_allclose(np.asarray(c2), np.asarray(c2r), rtol=1e-5, atol=1e-5)

    assert y.shape == (B, T, O) and h_n.shape == (L, B, H) and c_n.shape == (L, B, H)
    print("KERNEL_OK")
</pallas_src>

<mosaic_0001>
module attributes {stable_mosaic.version = 11 : i64} {
  func.func @_net_kernel(%arg0: memref<2x8x16xf32, #tpu.memory_space<vmem>>, %arg1: memref<2x2x32xf32, #tpu.memory_space<vmem>>, %arg2: memref<2x2x32xf32, #tpu.memory_space<vmem>>, %arg3: memref<16x128xf32, #tpu.memory_space<vmem>>, %arg4: memref<32x128xf32, #tpu.memory_space<vmem>>, %arg5: memref<1x128xf32, #tpu.memory_space<vmem>>, %arg6: memref<32x128xf32, #tpu.memory_space<vmem>>, %arg7: memref<32x128xf32, #tpu.memory_space<vmem>>, %arg8: memref<1x128xf32, #tpu.memory_space<vmem>>, %arg9: memref<32x4xf32, #tpu.memory_space<vmem>>, %arg10: memref<1x4xf32, #tpu.memory_space<vmem>>, %arg11: memref<2x8x4xf32, #tpu.memory_space<vmem>>, %arg12: memref<2x2x32xf32, #tpu.memory_space<vmem>>, %arg13: memref<2x2x32xf32, #tpu.memory_space<vmem>>, %arg14: memref<16x128xf32, #tpu.memory_space<vmem>>, %arg15: memref<16x32xf32, #tpu.memory_space<vmem>>) attributes {dimension_semantics = [], scalar_prefetch = 0 : i64, scratch_operands = 2 : i64, tpu.core_type = #tpu.core_type<tc>} {
    %c0 = arith.constant 0 : index
    %c0_0 = arith.constant 0 : index
    %c0_1 = arith.constant 0 : index
    %0 = vector.load %arg0[%c0, %c0_0, %c0_1] : memref<2x8x16xf32, #tpu.memory_space<vmem>>, vector<2x8x16xf32>
    %1 = vector.extract_strided_slice %0 {offsets = [0, 0, 0], sizes = [2, 1, 16], strides = [1, 1, 1]} : vector<2x8x16xf32> to vector<2x1x16xf32>
    %2 = vector.shape_cast %1 : vector<2x1x16xf32> to vector<2x16xf32>
    %3 = vector.extract_strided_slice %0 {offsets = [0, 1, 0], sizes = [2, 1, 16], strides = [1, 1, 1]} : vector<2x8x16xf32> to vector<2x1x16xf32>
    %4 = vector.shape_cast %3 : vector<2x1x16xf32> to vector<2x16xf32>
    %5 = vector.extract_strided_slice %0 {offsets = [0, 2, 0], sizes = [2, 1, 16], strides = [1, 1, 1]} : vector<2x8x16xf32> to vector<2x1x16xf32>
    %6 = vector.shape_cast %5 : vector<2x1x16xf32> to vector<2x16xf32>
    %7 = vector.extract_strided_slice %0 {offsets = [0, 3, 0], sizes = [2, 1, 16], strides = [1, 1, 1]} : vector<2x8x16xf32> to vector<2x1x16xf32>
    %8 = vector.shape_cast %7 : vector<2x1x16xf32> to vector<2x16xf32>
    %9 = vector.extract_strided_slice %0 {offsets = [0, 4, 0], sizes = [2, 1, 16], strides = [1, 1, 1]} : vector<2x8x16xf32> to vector<2x1x16xf32>
    %10 = vector.shape_cast %9 : vector<2x1x16xf32> to vector<2x16xf32>
    %11 = vector.extract_strided_slice %0 {offsets = [0, 5, 0], sizes = [2, 1, 16], strides = [1, 1, 1]} : vector<2x8x16xf32> to vector<2x1x16xf32>
    %12 = vector.shape_cast %11 : vector<2x1x16xf32> to vector<2x16xf32>
    %13 = vector.extract_strided_slice %0 {offsets = [0, 6, 0], sizes = [2, 1, 16], strides = [1, 1, 1]} : vector<2x8x16xf32> to vector<2x1x16xf32>
    %14 = vector.shape_cast %13 : vector<2x1x16xf32> to vector<2x16xf32>
    %15 = vector.extract_strided_slice %0 {offsets = [0, 7, 0], sizes = [2, 1, 16], strides = [1, 1, 1]} : vector<2x8x16xf32> to vector<2x1x16xf32>
    %16 = vector.shape_cast %15 : vector<2x1x16xf32> to vector<2x16xf32>
    %17 = tpu.concatenate %2, %4, %6, %8, %10, %12, %14, %16 in 0 : vector<2x16xf32>, vector<2x16xf32>, vector<2x16xf32>, vector<2x16xf32>, vector<2x16xf32>, vector<2x16xf32>, vector<2x16xf32>, vector<2x16xf32> -> vector<16x16xf32>
    %c0_2 = arith.constant 0 : index
    %c0_3 = arith.constant 0 : index
    %18 = vector.load %arg3[%c0_2, %c0_3] : memref<16x128xf32, #tpu.memory_space<vmem>>, vector<16x128xf32>
    %cst = arith.constant dense<0.000000e+00> : vector<16x128xf32>
    %19 = tpu.matmul %17, %18, %cst {dimension_numbers = #tpu.dot_dimension_numbers<[1], [0], [0], [1], [0, 0, 1, 1], [], []>} : vector<16x16xf32>, vector<16x128xf32>, vector<16x128xf32> -> vector<16x128xf32>
    %c0_4 = arith.constant 0 : index
    %c0_5 = arith.constant 0 : index
    %20 = vector.load %arg5[%c0_4, %c0_5] : memref<1x128xf32, #tpu.memory_space<vmem>>, vector<1x128xf32>
    %21 = vector.broadcast %20 : vector<1x128xf32> to vector<16x128xf32>
    %22 = arith.addf %19, %21 : vector<16x128xf32>
    %c0_6 = arith.constant 0 : index
    %c0_7 = arith.constant 0 : index
    %23 = vector.load %arg14[%c0_6, %c0_7] : memref<16x128xf32, #tpu.memory_space<vmem>>, vector<16x128xf32>
    tpu.vector_store %arg14[%c0_6, %c0_7], %22 {strides = array<i32>} : memref<16x128xf32, #tpu.memory_space<vmem>>, vector<16x128xf32>,
    %c0_8 = arith.constant 0 : index
    %c0_9 = arith.constant 0 : index
    %24 = vector.load %arg4[%c0_8, %c0_9] : memref<32x128xf32, #tpu.memory_space<vmem>>, vector<32x128xf32>
    %c0_10 = arith.constant 0 : index
    %c0_11 = arith.constant 0 : index
    %c0_12 = arith.constant 0 : index
    %25 = vector.load %arg1[%c0_10, %c0_11, %c0_12] : memref<2x2x32xf32, #tpu.memory_space<vmem>>, vector<1x2x32xf32>
    %26 = vector.shape_cast %25 : vector<1x2x32xf32> to vector<2x32xf32>
    %c0_13 = arith.constant 0 : index
    %c0_14 = arith.constant 0 : index
    %c0_15 = arith.constant 0 : index
    %27 = vector.load %arg2[%c0_13, %c0_14, %c0_15] : memref<2x2x32xf32, #tpu.memory_space<vmem>>, vector<1x2x32xf32>
    %28 = vector.shape_cast %27 : vector<1x2x32xf32> to vector<2x32xf32>
    %cst_16 = arith.constant 0.000000e+00 : f32
    %29 = vector.broadcast %cst_16 : f32 to vector<2x96xf32>
    %30 = tpu.concatenate %28, %29 in 1 : vector<2x32xf32>, vector<2x96xf32> -> vector<2x128xf32>
    %c0_17 = arith.constant 0 : index
    %c0_18 = arith.constant 0 : index
    %31 = vector.load %arg14[%c0_17, %c0_18] : memref<16x128xf32, #tpu.memory_space<vmem>>, vector<2x128xf32>
    %cst_19 = arith.constant dense<0.000000e+00> : vector<2x128xf32>
    %32 = tpu.matmul %26, %24, %cst_19 {dimension_numbers = #tpu.dot_dimension_numbers<[1], [0], [0], [1], [0, 0, 1, 1], [], []>} : vector<2x32xf32>, vector<32x128xf32>, vector<2x128xf32> -> vector<2x128xf32>
    %33 = arith.addf %31, %32 : vector<2x128xf32>
    %34 = arith.negf %33 : vector<2x128xf32>
    %35 = math.exp %34 : vector<2x128xf32>
    %cst_20 = arith.constant 1.000000e+00 : f32
    %36 = vector.broadcast %cst_20 : f32 to vector<2x128xf32>
    %37 = arith.addf %36, %35 : vector<2x128xf32>
    %38 = arith.divf %36, %37 : vector<2x128xf32>
    %39 = math.tanh %33 : vector<2x128xf32>
    %c96_i32 = arith.constant 96 : i32
    %40 = tpu.dynamic_rotate %38 by %c96_i32 dim 1 : vector<2x128xf32>, i32 -> vector<2x128xf32>
    %c64_i32 = arith.constant 64 : i32
    %41 = tpu.dynamic_rotate %39 by %c64_i32 dim 1 : vector<2x128xf32>, i32 -> vector<2x128xf32>
    %c32_i32 = arith.constant 32 : i32
    %42 = tpu.dynamic_rotate %38 by %c32_i32 dim 1 : vector<2x128xf32>, i32 -> vector<2x128xf32>
    %43 = arith.mulf %40, %30 : vector<2x128xf32>
    %44 = arith.mulf %38, %41 : vector<2x128xf32>
    %45 = arith.addf %43, %44 : vector<2x128xf32>
    %46 = math.tanh %45 : vector<2x128xf32>
    %47 = arith.mulf %42, %46 : vector<2x128xf32>
    %48 = vector.extract_strided_slice %47 {offsets = [0, 0], sizes = [2, 32], strides = [1, 1]} : vector<2x128xf32> to vector<2x32xf32>
    %c0_21 = arith.constant 0 : index
    %c0_22 = arith.constant 0 : index
    %49 = vector.load %arg15[%c0_21, %c0_22] : memref<16x32xf32, #tpu.memory_space<vmem>>, vector<2x32xf32>
    tpu.vector_store %arg15[%c0_21, %c0_22], %48 {strides = array<i32>} : memref<16x32xf32, #tpu.memory_space<vmem>>, vector<2x32xf32>,
    %c2 = arith.constant 2 : index
    %c0_23 = arith.constant 0 : index
    %50 = vector.load %arg14[%c2, %c0_23] : memref<16x128xf32, #tpu.memory_space<vmem>>, vector<2x128xf32>
    %cst_24 = arith.constant dense<0.000000e+00> : vector<2x128xf32>
    %51 = tpu.matmul %48, %24, %cst_24 {dimension_numbers = #tpu.dot_dimension_numbers<[1], [0], [0], [1], [0, 0, 1, 1], [], []>} : vector<2x32xf32>, vector<32x128xf32>, vector<2x128xf32> -> vector<2x128xf32>
    %52 = arith.addf %50, %51 : vector<2x128xf32>
    %53 = arith.negf %52 : vector<2x128xf32>
    %54 = math.exp %53 : vector<2x128xf32>
    %cst_25 = arith.constant 1.000000e+00 : f32
    %55 = vector.broadcast %cst_25 : f32 to vector<2x128xf32>
    %56 = arith.addf %55, %54 : vector<2x128xf32>
    %57 = arith.divf %55, %56 : vector<2x128xf32>
    %58 = math.tanh %52 : vector<2x128xf32>
    %c96_i32_26 = arith.constant 96 : i32
    %59 = tpu.dynamic_rotate %57 by %c96_i32_26 dim 1 : vector<2x128xf32>, i32 -> vector<2x128xf32>
    %c64_i32_27 = arith.constant 64 : i32
    %60 = tpu.dynamic_rotate %58 by %c64_i32_27 dim 1 : vector<2x128xf32>, i32 -> vector<2x128xf32>
    %c32_i32_28 = arith.constant 32 : i32
    %61 = tpu.dynamic_rotate %57 by %c32_i32_28 dim 1 : vector<2x128xf32>, i32 -> vector<2x128xf32>
    %62 = arith.mulf %59, %45 : vector<2x128xf32>
    %63 = arith.mulf %57, %60 : vector<2x128xf32>
    %64 = arith.addf %62, %63 : vector<2x128xf32>
    %65 = math.tanh %64 : vector<2x128xf32>
    %66 = arith.mulf %61, %65 : vector<2x128xf32>
    %67 = vector.extract_strided_slice %66 {offsets = [0, 0], sizes = [2, 32], strides = [1, 1]} : vector<2x128xf32> to vector<2x32xf32>
    %c2_29 = arith.constant 2 : index
    %c0_30 = arith.constant 0 : index
    %68 = vector.load %arg15[%c2_29, %c0_30] : memref<16x32xf32, #tpu.memory_space<vmem>>, vector<2x32xf32>
    tpu.vector_store %arg15[%c2_29, %c0_30], %67 {strides = array<i32>} : memref<16x32xf32, #tpu.memory_space<vmem>>, vector<2x32xf32>,
    %c4 = arith.constant 4 : index
    %c0_31 = arith.constant 0 : index
    %69 = vector.load %arg14[%c4, %c0_31] : memref<16x128xf32, #tpu.memory_space<vmem>>, vector<2x128xf32>
    %cst_32 = arith.constant dense<0.000000e+00> : vector<2x128xf32>
    %70 = tpu.matmul %67, %24, %cst_32 {dimension_numbers = #tpu.dot_dimension_numbers<[1], [0], [0], [1], [0, 0, 1, 1], [], []>} : vector<2x32xf32>, vector<32x128xf32>, vector<2x128xf32> -> vector<2x128xf32>
    %71 = arith.addf %69, %70 : vector<2x128xf32>
    %72 = arith.negf %71 : vector<2x128xf32>
    %73 = math.exp %72 : vector<2x128xf32>
    %cst_33 = arith.constant 1.000000e+00 : f32
    %74 = vector.broadcast %cst_33 : f32 to vector<2x128xf32>
    %75 = arith.addf %74, %73 : vector<2x128xf32>
    %76 = arith.divf %74, %75 : vector<2x128xf32>
    %77 = math.tanh %71 : vector<2x128xf32>
    %c96_i32_34 = arith.constant 96 : i32
    %78 = tpu.dynamic_rotate %76 by %c96_i32_34 dim 1 : vector<2x128xf32>, i32 -> vector<2x128xf32>
    %c64_i32_35 = arith.constant 64 : i32
    %79 = tpu.dynamic_rotate %77 by %c64_i32_35 dim 1 : vector<2x128xf32>, i32 -> vector<2x128xf32>
    %c32_i32_36 = arith.constant 32 : i32
    %80 = tpu.dynamic_rotate %76 by %c32_i32_36 dim 1 : vector<2x128xf32>, i32 -> vector<2x128xf32>
    %81 = arith.mulf %78, %64 : vector<2x128xf32>
    %82 = arith.mulf %76, %79 : vector<2x128xf32>
    %83 = arith.addf %81, %82 : vector<2x128xf32>
    %84 = math.tanh %83 : vector<2x128xf32>
    %85 = arith.mulf %80, %84 : vector<2x128xf32>
    %86 = vector.extract_strided_slice %85 {offsets = [0, 0], sizes = [2, 32], strides = [1, 1]} : vector<2x128xf32> to vector<2x32xf32>
    %c4_37 = arith.constant 4 : index
    %c0_38 = arith.constant 0 : index
    %87 = vector.load %arg15[%c4_37, %c0_38] : memref<16x32xf32, #tpu.memory_space<vmem>>, vector<2x32xf32>
    tpu.vector_store %arg15[%c4_37, %c0_38], %86 {strides = array<i32>} : memref<16x32xf32, #tpu.memory_space<vmem>>, vector<2x32xf32>,
    %c6 = arith.constant 6 : index
    %c0_39 = arith.constant 0 : index
    %88 = vector.load %arg14[%c6, %c0_39] : memref<16x128xf32, #tpu.memory_space<vmem>>, vector<2x128xf32>
    %cst_40 = arith.constant dense<0.000000e+00> : vector<2x128xf32>
    %89 = tpu.matmul %86, %24, %cst_40 {dimension_numbers = #tpu.dot_dimension_numbers<[1], [0], [0], [1], [0, 0, 1, 1], [], []>} : vector<2x32xf32>, vector<32x128xf32>, vector<2x128xf32> -> vector<2x128xf32>
    %90 = arith.addf %88, %89 : vector<2x128xf32>
    %91 = arith.negf %90 : vector<2x128xf32>
    %92 = math.exp %91 : vector<2x128xf32>
    %cst_41 = arith.constant 1.000000e+00 : f32
    %93 = vector.broadcast %cst_41 : f32 to vector<2x128xf32>
    %94 = arith.addf %93, %92 : vector<2x128xf32>
    %95 = arith.divf %93, %94 : vector<2x128xf32>
    %96 = math.tanh %90 : vector<2x128xf32>
    %c96_i32_42 = arith.constant 96 : i32
    %97 = tpu.dynamic_rotate %95 by %c96_i32_42 dim 1 : vector<2x128xf32>, i32 -> vector<2x128xf32>
    %c64_i32_43 = arith.constant 64 : i32
    %98 = tpu.dynamic_rotate %96 by %c64_i32_43 dim 1 : vector<2x128xf32>, i32 -> vector<2x128xf32>
    %c32_i32_44 = arith.constant 32 : i32
    %99 = tpu.dynamic_rotate %95 by %c32_i32_44 dim 1 : vector<2x128xf32>, i32 -> vector<2x128xf32>
    %100 = arith.mulf %97, %83 : vector<2x128xf32>
    %101 = arith.mulf %95, %98 : vector<2x128xf32>
    %102 = arith.addf %100, %101 : vector<2x128xf32>
    %103 = math.tanh %102 : vector<2x128xf32>
    %104 = arith.mulf %99, %103 : vector<2x128xf32>
    %105 = vector.extract_strided_slice %104 {offsets = [0, 0], sizes = [2, 32], strides = [1, 1]} : vector<2x128xf32> to vector<2x32xf32>
    %c6_45 = arith.constant 6 : index
    %c0_46 = arith.constant 0 : index
    %106 = vector.load %arg15[%c6_45, %c0_46] : memref<16x32xf32, #tpu.memory_space<vmem>>, vector<2x32xf32>
    tpu.vector_store %arg15[%c6_45, %c0_46], %105 {strides = array<i32>} : memref<16x32xf32, #tpu.memory_space<vmem>>, vector<2x32xf32>,
    %c8 = arith.constant 8 : index
    %c0_47 = arith.constant 0 : index
    %107 = vector.load %arg14[%c8, %c0_47] : memref<16x128xf32, #tpu.memory_space<vmem>>, vector<2x128xf32>
    %cst_48 = arith.constant dense<0.000000e+00> : vector<2x128xf32>
    %108 = tpu.matmul %105, %24, %cst_48 {dimension_numbers = #tpu.dot_dimension_numbers<[1], [0], [0], [1], [0, 0, 1, 1], [], []>} : vector<2x32xf32>, vector<32x128xf32>, vector<2x128xf32> -> vector<2x128xf32>
    %109 = arith.addf %107, %108 : vector<2x128xf32>
    %110 = arith.negf %109 : vector<2x128xf32>
    %111 = math.exp %110 : vector<2x128xf32>
    %cst_49 = arith.constant 1.000000e+00 : f32
    %112 = vector.broadcast %cst_49 : f32 to vector<2x128xf32>
    %113 = arith.addf %112, %111 : vector<2x128xf32>
    %114 = arith.divf %112, %113 : vector<2x128xf32>
    %115 = math.tanh %109 : vector<2x128xf32>
    %c96_i32_50 = arith.constant 96 : i32
    %116 = tpu.dynamic_rotate %114 by %c96_i32_50 dim 1 : vector<2x128xf32>, i32 -> vector<2x128xf32>
    %c64_i32_51 = arith.constant 64 : i32
    %117 = tpu.dynamic_rotate %115 by %c64_i32_51 dim 1 : vector<2x128xf32>, i32 -> vector<2x128xf32>
    %c32_i32_52 = arith.constant 32 : i32
    %118 = tpu.dynamic_rotate %114 by %c32_i32_52 dim 1 : vector<2x128xf32>, i32 -> vector<2x128xf32>
    %119 = arith.mulf %116, %102 : vector<2x128xf32>
    %120 = arith.mulf %114, %117 : vector<2x128xf32>
    %121 = arith.addf %119, %120 : vector<2x128xf32>
    %122 = math.tanh %121 : vector<2x128xf32>
    %123 = arith.mulf %118, %122 : vector<2x128xf32>
    %124 = vector.extract_strided_slice %123 {offsets = [0, 0], sizes = [2, 32], strides = [1, 1]} : vector<2x128xf32> to vector<2x32xf32>
    %c8_53 = arith.constant 8 : index
    %c0_54 = arith.constant 0 : index
    %125 = vector.load %arg15[%c8_53, %c0_54] : memref<16x32xf32, #tpu.memory_space<vmem>>, vector<2x32xf32>
    tpu.vector_store %arg15[%c8_53, %c0_54], %124 {strides = array<i32>} : memref<16x32xf32, #tpu.memory_space<vmem>>, vector<2x32xf32>,
    %c10 = arith.constant 10 : index
    %c0_55 = arith.constant 0 : index
    %126 = vector.load %arg14[%c10, %c0_55] : memref<16x128xf32, #tpu.memory_space<vmem>>, vector<2x128xf32>
    %cst_56 = arith.constant dense<0.000000e+00> : vector<2x128xf32>
    %127 = tpu.matmul %124, %24, %cst_56 {dimension_numbers = #tpu.dot_dimension_numbers<[1], [0], [0], [1], [0, 0, 1, 1], [], []>} : vector<2x32xf32>, vector<32x128xf32>, vector<2x128xf32> -> vector<2x128xf32>
    %128 = arith.addf %126, %127 : vector<2x128xf32>
    %129 = arith.negf %128 : vector<2x128xf32>
    %130 = math.exp %129 : vector<2x128xf32>
    %cst_57 = arith.constant 1.000000e+00 : f32
    %131 = vector.broadcast %cst_57 : f32 to vector<2x128xf32>
    %132 = arith.addf %131, %130 : vector<2x128xf32>
    %133 = arith.divf %131, %132 : vector<2x128xf32>
    %134 = math.tanh %128 : vector<2x128xf32>
    %c96_i32_58 = arith.constant 96 : i32
    %135 = tpu.dynamic_rotate %133 by %c96_i32_58 dim 1 : vector<2x128xf32>, i32 -> vector<2x128xf32>
    %c64_i32_59 = arith.constant 64 : i32
    %136 = tpu.dynamic_rotate %134 by %c64_i32_59 dim 1 : vector<2x128xf32>, i32 -> vector<2x128xf32>
    %c32_i32_60 = arith.constant 32 : i32
    %137 = tpu.dynamic_rotate %133 by %c32_i32_60 dim 1 : vector<2x128xf32>, i32 -> vector<2x128xf32>
    %138 = arith.mulf %135, %121 : vector<2x128xf32>
    %139 = arith.mulf %133, %136 : vector<2x128xf32>
    %140 = arith.addf %138, %139 : vector<2x128xf32>
    %141 = math.tanh %140 : vector<2x128xf32>
    %142 = arith.mulf %137, %141 : vector<2x128xf32>
    %143 = vector.extract_strided_slice %142 {offsets = [0, 0], sizes = [2, 32], strides = [1, 1]} : vector<2x128xf32> to vector<2x32xf32>
    %c10_61 = arith.constant 10 : index
    %c0_62 = arith.constant 0 : index
    %144 = vector.load %arg15[%c10_61, %c0_62] : memref<16x32xf32, #tpu.memory_space<vmem>>, vector<2x32xf32>
    tpu.vector_store %arg15[%c10_61, %c0_62], %143 {strides = array<i32>} : memref<16x32xf32, #tpu.memory_space<vmem>>, vector<2x32xf32>,
    %c12 = arith.constant 12 : index
    %c0_63 = arith.constant 0 : index
    %145 = vector.load %arg14[%c12, %c0_63] : memref<16x128xf32, #tpu.memory_space<vmem>>, vector<2x128xf32>
    %cst_64 = arith.constant dense<0.000000e+00> : vector<2x128xf32>
    %146 = tpu.matmul %143, %24, %cst_64 {dimension_numbers = #tpu.dot_dimension_numbers<[1], [0], [0], [1], [0, 0, 1, 1], [], []>} : vector<2x32xf32>, vector<32x128xf32>, vector<2x128xf32> -> vector<2x128xf32>
    %147 = arith.addf %145, %146 : vector<2x128xf32>
    %148 = arith.negf %147 : vector<2x128xf32>
    %149 = math.exp %148 : vector<2x128xf32>
    %cst_65 = arith.constant 1.000000e+00 : f32
    %150 = vector.broadcast %cst_65 : f32 to vector<2x128xf32>
    %151 = arith.addf %150, %149 : vector<2x128xf32>
    %152 = arith.divf %150, %151 : vector<2x128xf32>
    %153 = math.tanh %147 : vector<2x128xf32>
    %c96_i32_66 = arith.constant 96 : i32
    %154 = tpu.dynamic_rotate %152 by %c96_i32_66 dim 1 : vector<2x128xf32>, i32 -> vector<2x128xf32>
    %c64_i32_67 = arith.constant 64 : i32
    %155 = tpu.dynamic_rotate %153 by %c64_i32_67 dim 1 : vector<2x128xf32>, i32 -> vector<2x128xf32>
    %c32_i32_68 = arith.constant 32 : i32
    %156 = tpu.dynamic_rotate %152 by %c32_i32_68 dim 1 : vector<2x128xf32>, i32 -> vector<2x128xf32>
    %157 = arith.mulf %154, %140 : vector<2x128xf32>
    %158 = arith.mulf %152, %155 : vector<2x128xf32>
    %159 = arith.addf %157, %158 : vector<2x128xf32>
    %160 = math.tanh %159 : vector<2x128xf32>
    %161 = arith.mulf %156, %160 : vector<2x128xf32>
    %162 = vector.extract_strided_slice %161 {offsets = [0, 0], sizes = [2, 32], strides = [1, 1]} : vector<2x128xf32> to vector<2x32xf32>
    %c12_69 = arith.constant 12 : index
    %c0_70 = arith.constant 0 : index
    %163 = vector.load %arg15[%c12_69, %c0_70] : memref<16x32xf32, #tpu.memory_space<vmem>>, vector<2x32xf32>
    tpu.vector_store %arg15[%c12_69, %c0_70], %162 {strides = array<i32>} : memref<16x32xf32, #tpu.memory_space<vmem>>, vector<2x32xf32>,
    %c14 = arith.constant 14 : index
    %c0_71 = arith.constant 0 : index
    %164 = vector.load %arg14[%c14, %c0_71] : memref<16x128xf32, #tpu.memory_space<vmem>>, vector<2x128xf32>
    %cst_72 = arith.constant dense<0.000000e+00> : vector<2x128xf32>
    %165 = tpu.matmul %162, %24, %cst_72 {dimension_numbers = #tpu.dot_dimension_numbers<[1], [0], [0], [1], [0, 0, 1, 1], [], []>} : vector<2x32xf32>, vector<32x128xf32>, vector<2x128xf32> -> vector<2x128xf32>
    %166 = arith.addf %164, %165 : vector<2x128xf32>
    %167 = arith.negf %166 : vector<2x128xf32>
    %168 = math.exp %167 : vector<2x128xf32>
    %cst_73 = arith.constant 1.000000e+00 : f32
    %169 = vector.broadcast %cst_73 : f32 to vector<2x128xf32>
    %170 = arith.addf %169, %168 : vector<2x128xf32>
    %171 = arith.divf %169, %170 : vector<2x128xf32>
    %172 = math.tanh %166 : vector<2x128xf32>
    %c96_i32_74 = arith.constant 96 : i32
    %173 = tpu.dynamic_rotate %171 by %c96_i32_74 dim 1 : vector<2x128xf32>, i32 -> vector<2x128xf32>
    %c64_i32_75 = arith.constant 64 : i32
    %174 = tpu.dynamic_rotate %172 by %c64_i32_75 dim 1 : vector<2x128xf32>, i32 -> vector<2x128xf32>
    %c32_i32_76 = arith.constant 32 : i32
    %175 = tpu.dynamic_rotate %171 by %c32_i32_76 dim 1 : vector<2x128xf32>, i32 -> vector<2x128xf32>
    %176 = arith.mulf %173, %159 : vector<2x128xf32>
    %177 = arith.mulf %171, %174 : vector<2x128xf32>
    %178 = arith.addf %176, %177 : vector<2x128xf32>
    %179 = math.tanh %178 : vector<2x128xf32>
    %180 = arith.mulf %175, %179 : vector<2x128xf32>
    %181 = vector.extract_strided_slice %180 {offsets = [0, 0], sizes = [2, 32], strides = [1, 1]} : vector<2x128xf32> to vector<2x32xf32>
    %c14_77 = arith.constant 14 : index
    %c0_78 = arith.constant 0 : index
    %182 = vector.load %arg15[%c14_77, %c0_78] : memref<16x32xf32, #tpu.memory_space<vmem>>, vector<2x32xf32>
    tpu.vector_store %arg15[%c14_77, %c0_78], %181 {strides = array<i32>} : memref<16x32xf32, #tpu.memory_space<vmem>>, vector<2x32xf32>,
    %c0_79 = arith.constant 0 : index
    %c0_80 = arith.constant 0 : index
    %c0_81 = arith.constant 0 : index
    %183 = vector.load %arg12[%c0_79, %c0_80, %c0_81] : memref<2x2x32xf32, #tpu.memory_space<vmem>>, vector<1x2x32xf32>
    %184 = vector.shape_cast %183 : vector<1x2x32xf32> to vector<2x32xf32>
    %185 = vector.shape_cast %181 : vector<2x32xf32> to vector<1x2x32xf32>
    tpu.vector_store %arg12[%c0_79, %c0_80, %c0_81], %185 {strides = array<i32>} : memref<2x2x32xf32, #tpu.memory_space<vmem>>, vector<1x2x32xf32>,
    %186 = vector.extract_strided_slice %178 {offsets = [0, 0], sizes = [2, 32], strides = [1, 1]} : vector<2x128xf32> to vector<2x32xf32>
    %c0_82 = arith.constant 0 : index
    %c0_83 = arith.constant 0 : index
    %c0_84 = arith.constant 0 : index
    %187 = vector.load %arg13[%c0_82, %c0_83, %c0_84] : memref<2x2x32xf32, #tpu.memory_space<vmem>>, vector<1x2x32xf32>
    %188 = vector.shape_cast %187 : vector<1x2x32xf32> to vector<2x32xf32>
    %189 = vector.shape_cast %186 : vector<2x32xf32> to vector<1x2x32xf32>
    tpu.vector_store %arg13[%c0_82, %c0_83, %c0_84], %189 {strides = array<i32>} : memref<2x2x32xf32, #tpu.memory_space<vmem>>, vector<1x2x32xf32>,
    %c0_85 = arith.constant 0 : index
    %c0_86 = arith.constant 0 : index
    %190 = vector.load %arg15[%c0_85, %c0_86] : memref<16x32xf32, #tpu.memory_space<vmem>>, vector<16x32xf32>
    %c0_87 = arith.constant 0 : index
    %c0_88 = arith.constant 0 : index
    %191 = vector.load %arg6[%c0_87, %c0_88] : memref<32x128xf32, #tpu.memory_space<vmem>>, vector<32x128xf32>
    %cst_89 = arith.constant dense<0.000000e+00> : vector<16x128xf32>
    %192 = tpu.matmul %190, %191, %cst_89 {dimension_numbers = #tpu.dot_dimension_numbers<[1], [0], [0], [1], [0, 0, 1, 1], [], []>} : vector<16x32xf32>, vector<32x128xf32>, vector<16x128xf32> -> vector<16x128xf32>
    %c0_90 = arith.constant 0 : index
    %c0_91 = arith.constant 0 : index
    %193 = vector.load %arg8[%c0_90, %c0_91] : memref<1x128xf32, #tpu.memory_space<vmem>>, vector<1x128xf32>
    %194 = vector.broadcast %193 : vector<1x128xf32> to vector<16x128xf32>
    %195 = arith.addf %192, %194 : vector<16x128xf32>
    %c0_92 = arith.constant 0 : index
    %c0_93 = arith.constant 0 : index
    %196 = vector.load %arg14[%c0_92, %c0_93] : memref<16x128xf32, #tpu.memory_space<vmem>>, vector<16x128xf32>
    tpu.vector_store %arg14[%c0_92, %c0_93], %195 {strides = array<i32>} : memref<16x128xf32, #tpu.memory_space<vmem>>, vector<16x128xf32>,
    %c0_94 = arith.constant 0 : index
    %c0_95 = arith.constant 0 : index
    %197 = vector.load %arg7[%c0_94, %c0_95] : memref<32x128xf32, #tpu.memory_space<vmem>>, vector<32x128xf32>
    %c1 = arith.constant 1 : index
    %c0_96 = arith.constant 0 : index
    %c0_97 = arith.constant 0 : index
    %198 = vector.load %arg1[%c1, %c0_96, %c0_97] : memref<2x2x32xf32, #tpu.memory_space<vmem>>, vector<1x2x32xf32>
    %199 = vector.shape_cast %198 : vector<1x2x32xf32> to vector<2x32xf32>
    %c1_98 = arith.constant 1 : index
    %c0_99 = arith.constant 0 : index
    %c0_100 = arith.constant 0 : index
    %200 = vector.load %arg2[%c1_98, %c0_99, %c0_100] : memref<2x2x32xf32, #tpu.memory_space<vmem>>, vector<1x2x32xf32>
    %201 = vector.shape_cast %200 : vector<1x2x32xf32> to vector<2x32xf32>
    %cst_101 = arith.constant 0.000000e+00 : f32
    %202 = vector.broadcast %cst_101 : f32 to vector<2x96xf32>
    %203 = tpu.concatenate %201, %202 in 1 : vector<2x32xf32>, vector<2x96xf32> -> vector<2x128xf32>
    %c0_102 = arith.constant 0 : index
    %c0_103 = arith.constant 0 : index
    %204 = vector.load %arg14[%c0_102, %c0_103] : memref<16x128xf32, #tpu.memory_space<vmem>>, vector<2x128xf32>
    %cst_104 = arith.constant dense<0.000000e+00> : vector<2x128xf32>
    %205 = tpu.matmul %199, %197, %cst_104 {dimension_numbers = #tpu.dot_dimension_numbers<[1], [0], [0], [1], [0, 0, 1, 1], [], []>} : vector<2x32xf32>, vector<32x128xf32>, vector<2x128xf32> -> vector<2x128xf32>
    %206 = arith.addf %204, %205 : vector<2x128xf32>
    %207 = arith.negf %206 : vector<2x128xf32>
    %208 = math.exp %207 : vector<2x128xf32>
    %cst_105 = arith.constant 1.000000e+00 : f32
    %209 = vector.broadcast %cst_105 : f32 to vector<2x128xf32>
    %210 = arith.addf %209, %208 : vector<2x128xf32>
    %211 = arith.divf %209, %210 : vector<2x128xf32>
    %212 = math.tanh %206 : vector<2x128xf32>
    %c96_i32_106 = arith.constant 96 : i32
    %213 = tpu.dynamic_rotate %211 by %c96_i32_106 dim 1 : vector<2x128xf32>, i32 -> vector<2x128xf32>
    %c64_i32_107 = arith.constant 64 : i32
    %214 = tpu.dynamic_rotate %212 by %c64_i32_107 dim 1 : vector<2x128xf32>, i32 -> vector<2x128xf32>
    %c32_i32_108 = arith.constant 32 : i32
    %215 = tpu.dynamic_rotate %211 by %c32_i32_108 dim 1 : vector<2x128xf32>, i32 -> vector<2x128xf32>
    %216 = arith.mulf %213, %203 : vector<2x128xf32>
    %217 = arith.mulf %211, %214 : vector<2x128xf32>
    %218 = arith.addf %216, %217 : vector<2x128xf32>
    %219 = math.tanh %218 : vector<2x128xf32>
    %220 = arith.mulf %215, %219 : vector<2x128xf32>
    %221 = vector.extract_strided_slice %220 {offsets = [0, 0], sizes = [2, 32], strides = [1, 1]} : vector<2x128xf32> to vector<2x32xf32>
    %c0_109 = arith.constant 0 : index
    %c0_110 = arith.constant 0 : index
    %222 = vector.load %arg15[%c0_109, %c0_110] : memref<16x32xf32, #tpu.memory_space<vmem>>, vector<2x32xf32>
    tpu.vector_store %arg15[%c0_109, %c0_110], %221 {strides = array<i32>} : memref<16x32xf32, #tpu.memory_space<vmem>>, vector<2x32xf32>,
    %c2_111 = arith.constant 2 : index
    %c0_112 = arith.constant 0 : index
    %223 = vector.load %arg14[%c2_111, %c0_112] : memref<16x128xf32, #tpu.memory_space<vmem>>, vector<2x128xf32>
    %cst_113 = arith.constant dense<0.000000e+00> : vector<2x128xf32>
    %224 = tpu.matmul %221, %197, %cst_113 {dimension_numbers = #tpu.dot_dimension_numbers<[1], [0], [0], [1], [0, 0, 1, 1], [], []>} : vector<2x32xf32>, vector<32x128xf32>, vector<2x128xf32> -> vector<2x128xf32>
    %225 = arith.addf %223, %224 : vector<2x128xf32>
    %226 = arith.negf %225 : vector<2x128xf32>
    %227 = math.exp %226 : vector<2x128xf32>
    %cst_114 = arith.constant 1.000000e+00 : f32
    %228 = vector.broadcast %cst_114 : f32 to vector<2x128xf32>
    %229 = arith.addf %228, %227 : vector<2x128xf32>
    %230 = arith.divf %228, %229 : vector<2x128xf32>
    %231 = math.tanh %225 : vector<2x128xf32>
    %c96_i32_115 = arith.constant 96 : i32
    %232 = tpu.dynamic_rotate %230 by %c96_i32_115 dim 1 : vector<2x128xf32>, i32 -> vector<2x128xf32>
    %c64_i32_116 = arith.constant 64 : i32
    %233 = tpu.dynamic_rotate %231 by %c64_i32_116 dim 1 : vector<2x128xf32>, i32 -> vector<2x128xf32>
    %c32_i32_117 = arith.constant 32 : i32
    %234 = tpu.dynamic_rotate %230 by %c32_i32_117 dim 1 : vector<2x128xf32>, i32 -> vector<2x128xf32>
    %235 = arith.mulf %232, %218 : vector<2x128xf32>
    %236 = arith.mulf %230, %233 : vector<2x128xf32>
    %237 = arith.addf %235, %236 : vector<2x128xf32>
    %238 = math.tanh %237 : vector<2x128xf32>
    %239 = arith.mulf %234, %238 : vector<2x128xf32>
    %240 = vector.extract_strided_slice %239 {offsets = [0, 0], sizes = [2, 32], strides = [1, 1]} : vector<2x128xf32> to vector<2x32xf32>
    %c2_118 = arith.constant 2 : index
    %c0_119 = arith.constant 0 : index
    %241 = vector.load %arg15[%c2_118, %c0_119] : memref<16x32xf32, #tpu.memory_space<vmem>>, vector<2x32xf32>
    tpu.vector_store %arg15[%c2_118, %c0_119], %240 {strides = array<i32>} : memref<16x32xf32, #tpu.memory_space<vmem>>, vector<2x32xf32>,
    %c4_120 = arith.constant 4 : index
    %c0_121 = arith.constant 0 : index
    %242 = vector.load %arg14[%c4_120, %c0_121] : memref<16x128xf32, #tpu.memory_space<vmem>>, vector<2x128xf32>
    %cst_122 = arith.constant dense<0.000000e+00> : vector<2x128xf32>
    %243 = tpu.matmul %240, %197, %cst_122 {dimension_numbers = #tpu.dot_dimension_numbers<[1], [0], [0], [1], [0, 0, 1, 1], [], []>} : vector<2x32xf32>, vector<32x128xf32>, vector<2x128xf32> -> vector<2x128xf32>
    %244 = arith.addf %242, %243 : vector<2x128xf32>
    %245 = arith.negf %244 : vector<2x128xf32>
    %246 = math.exp %245 : vector<2x128xf32>
    %cst_123 = arith.constant 1.000000e+00 : f32
    %247 = vector.broadcast %cst_123 : f32 to vector<2x128xf32>
    %248 = arith.addf %247, %246 : vector<2x128xf32>
    %249 = arith.divf %247, %248 : vector<2x128xf32>
    %250 = math.tanh %244 : vector<2x128xf32>
    %c96_i32_124 = arith.constant 96 : i32
    %251 = tpu.dynamic_rotate %249 by %c96_i32_124 dim 1 : vector<2x128xf32>, i32 -> vector<2x128xf32>
    %c64_i32_125 = arith.constant 64 : i32
    %252 = tpu.dynamic_rotate %250 by %c64_i32_125 dim 1 : vector<2x128xf32>, i32 -> vector<2x128xf32>
    %c32_i32_126 = arith.constant 32 : i32
    %253 = tpu.dynamic_rotate %249 by %c32_i32_126 dim 1 : vector<2x128xf32>, i32 -> vector<2x128xf32>
    %254 = arith.mulf %251, %237 : vector<2x128xf32>
    %255 = arith.mulf %249, %252 : vector<2x128xf32>
    %256 = arith.addf %254, %255 : vector<2x128xf32>
    %257 = math.tanh %256 : vector<2x128xf32>
    %258 = arith.mulf %253, %257 : vector<2x128xf32>
    %259 = vector.extract_strided_slice %258 {offsets = [0, 0], sizes = [2, 32], strides = [1, 1]} : vector<2x128xf32> to vector<2x32xf32>
    %c4_127 = arith.constant 4 : index
    %c0_128 = arith.constant 0 : index
    %260 = vector.load %arg15[%c4_127, %c0_128] : memref<16x32xf32, #tpu.memory_space<vmem>>, vector<2x32xf32>
    tpu.vector_store %arg15[%c4_127, %c0_128], %259 {strides = array<i32>} : memref<16x32xf32, #tpu.memory_space<vmem>>, vector<2x32xf32>,
    %c6_129 = arith.constant 6 : index
    %c0_130 = arith.constant 0 : index
    %261 = vector.load %arg14[%c6_129, %c0_130] : memref<16x128xf32, #tpu.memory_space<vmem>>, vector<2x128xf32>
    %cst_131 = arith.constant dense<0.000000e+00> : vector<2x128xf32>
    %262 = tpu.matmul %259, %197, %cst_131 {dimension_numbers = #tpu.dot_dimension_numbers<[1], [0], [0], [1], [0, 0, 1, 1], [], []>} : vector<2x32xf32>, vector<32x128xf32>, vector<2x128xf32> -> vector<2x128xf32>
    %263 = arith.addf %261, %262 : vector<2x128xf32>
    %264 = arith.negf %263 : vector<2x128xf32>
    %265 = math.exp %264 : vector<2x128xf32>
    %cst_132 = arith.constant 1.000000e+00 : f32
    %266 = vector.broadcast %cst_132 : f32 to vector<2x128xf32>
    %267 = arith.addf %266, %265 : vector<2x128xf32>
    %268 = arith.divf %266, %267 : vector<2x128xf32>
    %269 = math.tanh %263 : vector<2x128xf32>
    %c96_i32_133 = arith.constant 96 : i32
    %270 = tpu.dynamic_rotate %268 by %c96_i32_133 dim 1 : vector<2x128xf32>, i32 -> vector<2x128xf32>
    %c64_i32_134 = arith.constant 64 : i32
    %271 = tpu.dynamic_rotate %269 by %c64_i32_134 dim 1 : vector<2x128xf32>, i32 -> vector<2x128xf32>
    %c32_i32_135 = arith.constant 32 : i32
    %272 = tpu.dynamic_rotate %268 by %c32_i32_135 dim 1 : vector<2x128xf32>, i32 -> vector<2x128xf32>
    %273 = arith.mulf %270, %256 : vector<2x128xf32>
    %274 = arith.mulf %268, %271 : vector<2x128xf32>
    %275 = arith.addf %273, %274 : vector<2x128xf32>
    %276 = math.tanh %275 : vector<2x128xf32>
    %277 = arith.mulf %272, %276 : vector<2x128xf32>
    %278 = vector.extract_strided_slice %277 {offsets = [0, 0], sizes = [2, 32], strides = [1, 1]} : vector<2x128xf32> to vector<2x32xf32>
    %c6_136 = arith.constant 6 : index
    %c0_137 = arith.constant 0 : index
    %279 = vector.load %arg15[%c6_136, %c0_137] : memref<16x32xf32, #tpu.memory_space<vmem>>, vector<2x32xf32>
    tpu.vector_store %arg15[%c6_136, %c0_137], %278 {strides = array<i32>} : memref<16x32xf32, #tpu.memory_space<vmem>>, vector<2x32xf32>,
    %c8_138 = arith.constant 8 : index
    %c0_139 = arith.constant 0 : index
    %280 = vector.load %arg14[%c8_138, %c0_139] : memref<16x128xf32, #tpu.memory_space<vmem>>, vector<2x128xf32>
    %cst_140 = arith.constant dense<0.000000e+00> : vector<2x128xf32>
    %281 = tpu.matmul %278, %197, %cst_140 {dimension_numbers = #tpu.dot_dimension_numbers<[1], [0], [0], [1], [0, 0, 1, 1], [], []>} : vector<2x32xf32>, vector<32x128xf32>, vector<2x128xf32> -> vector<2x128xf32>
    %282 = arith.addf %280, %281 : vector<2x128xf32>
    %283 = arith.negf %282 : vector<2x128xf32>
    %284 = math.exp %283 : vector<2x128xf32>
    %cst_141 = arith.constant 1.000000e+00 : f32
    %285 = vector.broadcast %cst_141 : f32 to vector<2x128xf32>
    %286 = arith.addf %285, %284 : vector<2x128xf32>
    %287 = arith.divf %285, %286 : vector<2x128xf32>
    %288 = math.tanh %282 : vector<2x128xf32>
    %c96_i32_142 = arith.constant 96 : i32
    %289 = tpu.dynamic_rotate %287 by %c96_i32_142 dim 1 : vector<2x128xf32>, i32 -> vector<2x128xf32>
    %c64_i32_143 = arith.constant 64 : i32
    %290 = tpu.dynamic_rotate %288 by %c64_i32_143 dim 1 : vector<2x128xf32>, i32 -> vector<2x128xf32>
    %c32_i32_144 = arith.constant 32 : i32
    %291 = tpu.dynamic_rotate %287 by %c32_i32_144 dim 1 : vector<2x128xf32>, i32 -> vector<2x128xf32>
    %292 = arith.mulf %289, %275 : vector<2x128xf32>
    %293 = arith.mulf %287, %290 : vector<2x128xf32>
    %294 = arith.addf %292, %293 : vector<2x128xf32>
    %295 = math.tanh %294 : vector<2x128xf32>
    %296 = arith.mulf %291, %295 : vector<2x128xf32>
    %297 = vector.extract_strided_slice %296 {offsets = [0, 0], sizes = [2, 32], strides = [1, 1]} : vector<2x128xf32> to vector<2x32xf32>
    %c8_145 = arith.constant 8 : index
    %c0_146 = arith.constant 0 : index
    %298 = vector.load %arg15[%c8_145, %c0_146] : memref<16x32xf32, #tpu.memory_space<vmem>>, vector<2x32xf32>
    tpu.vector_store %arg15[%c8_145, %c0_146], %297 {strides = array<i32>} : memref<16x32xf32, #tpu.memory_space<vmem>>, vector<2x32xf32>,
    %c10_147 = arith.constant 10 : index
    %c0_148 = arith.constant 0 : index
    %299 = vector.load %arg14[%c10_147, %c0_148] : memref<16x128xf32, #tpu.memory_space<vmem>>, vector<2x128xf32>
    %cst_149 = arith.constant dense<0.000000e+00> : vector<2x128xf32>
    %300 = tpu.matmul %297, %197, %cst_149 {dimension_numbers = #tpu.dot_dimension_numbers<[1], [0], [0], [1], [0, 0, 1, 1], [], []>} : vector<2x32xf32>, vector<32x128xf32>, vector<2x128xf32> -> vector<2x128xf32>
    %301 = arith.addf %299, %300 : vector<2x128xf32>
    %302 = arith.negf %301 : vector<2x128xf32>
    %303 = math.exp %302 : vector<2x128xf32>
    %cst_150 = arith.constant 1.000000e+00 : f32
    %304 = vector.broadcast %cst_150 : f32 to vector<2x128xf32>
    %305 = arith.addf %304, %303 : vector<2x128xf32>
    %306 = arith.divf %304, %305 : vector<2x128xf32>
    %307 = math.tanh %301 : vector<2x128xf32>
    %c96_i32_151 = arith.constant 96 : i32
    %308 = tpu.dynamic_rotate %306 by %c96_i32_151 dim 1 : vector<2x128xf32>, i32 -> vector<2x128xf32>
    %c64_i32_152 = arith.constant 64 : i32
    %309 = tpu.dynamic_rotate %307 by %c64_i32_152 dim 1 : vector<2x128xf32>, i32 -> vector<2x128xf32>
    %c32_i32_153 = arith.constant 32 : i32
    %310 = tpu.dynamic_rotate %306 by %c32_i32_153 dim 1 : vector<2x128xf32>, i32 -> vector<2x128xf32>
    %311 = arith.mulf %308, %294 : vector<2x128xf32>
    %312 = arith.mulf %306, %309 : vector<2x128xf32>
    %313 = arith.addf %311, %312 : vector<2x128xf32>
    %314 = math.tanh %313 : vector<2x128xf32>
    %315 = arith.mulf %310, %314 : vector<2x128xf32>
    %316 = vector.extract_strided_slice %315 {offsets = [0, 0], sizes = [2, 32], strides = [1, 1]} : vector<2x128xf32> to vector<2x32xf32>
    %c10_154 = arith.constant 10 : index
    %c0_155 = arith.constant 0 : index
    %317 = vector.load %arg15[%c10_154, %c0_155] : memref<16x32xf32, #tpu.memory_space<vmem>>, vector<2x32xf32>
    tpu.vector_store %arg15[%c10_154, %c0_155], %316 {strides = array<i32>} : memref<16x32xf32, #tpu.memory_space<vmem>>, vector<2x32xf32>,
    %c12_156 = arith.constant 12 : index
    %c0_157 = arith.constant 0 : index
    %318 = vector.load %arg14[%c12_156, %c0_157] : memref<16x128xf32, #tpu.memory_space<vmem>>, vector<2x128xf32>
    %cst_158 = arith.constant dense<0.000000e+00> : vector<2x128xf32>
    %319 = tpu.matmul %316, %197, %cst_158 {dimension_numbers = #tpu.dot_dimension_numbers<[1], [0], [0], [1], [0, 0, 1, 1], [], []>} : vector<2x32xf32>, vector<32x128xf32>, vector<2x128xf32> -> vector<2x128xf32>
    %320 = arith.addf %318, %319 : vector<2x128xf32>
    %321 = arith.negf %320 : vector<2x128xf32>
    %322 = math.exp %321 : vector<2x128xf32>
    %cst_159 = arith.constant 1.000000e+00 : f32
    %323 = vector.broadcast %cst_159 : f32 to vector<2x128xf32>
    %324 = arith.addf %323, %322 : vector<2x128xf32>
    %325 = arith.divf %323, %324 : vector<2x128xf32>
    %326 = math.tanh %320 : vector<2x128xf32>
    %c96_i32_160 = arith.constant 96 : i32
    %327 = tpu.dynamic_rotate %325 by %c96_i32_160 dim 1 : vector<2x128xf32>, i32 -> vector<2x128xf32>
    %c64_i32_161 = arith.constant 64 : i32
    %328 = tpu.dynamic_rotate %326 by %c64_i32_161 dim 1 : vector<2x128xf32>, i32 -> vector<2x128xf32>
    %c32_i32_162 = arith.constant 32 : i32
    %329 = tpu.dynamic_rotate %325 by %c32_i32_162 dim 1 : vector<2x128xf32>, i32 -> vector<2x128xf32>
    %330 = arith.mulf %327, %313 : vector<2x128xf32>
    %331 = arith.mulf %325, %328 : vector<2x128xf32>
    %332 = arith.addf %330, %331 : vector<2x128xf32>
    %333 = math.tanh %332 : vector<2x128xf32>
    %334 = arith.mulf %329, %333 : vector<2x128xf32>
    %335 = vector.extract_strided_slice %334 {offsets = [0, 0], sizes = [2, 32], strides = [1, 1]} : vector<2x128xf32> to vector<2x32xf32>
    %c12_163 = arith.constant 12 : index
    %c0_164 = arith.constant 0 : index
    %336 = vector.load %arg15[%c12_163, %c0_164] : memref<16x32xf32, #tpu.memory_space<vmem>>, vector<2x32xf32>
    tpu.vector_store %arg15[%c12_163, %c0_164], %335 {strides = array<i32>} : memref<16x32xf32, #tpu.memory_space<vmem>>, vector<2x32xf32>,
    %c14_165 = arith.constant 14 : index
    %c0_166 = arith.constant 0 : index
    %337 = vector.load %arg14[%c14_165, %c0_166] : memref<16x128xf32, #tpu.memory_space<vmem>>, vector<2x128xf32>
    %cst_167 = arith.constant dense<0.000000e+00> : vector<2x128xf32>
    %338 = tpu.matmul %335, %197, %cst_167 {dimension_numbers = #tpu.dot_dimension_numbers<[1], [0], [0], [1], [0, 0, 1, 1], [], []>} : vector<2x32xf32>, vector<32x128xf32>, vector<2x128xf32> -> vector<2x128xf32>
    %339 = arith.addf %337, %338 : vector<2x128xf32>
    %340 = arith.negf %339 : vector<2x128xf32>
    %341 = math.exp %340 : vector<2x128xf32>
    %cst_168 = arith.constant 1.000000e+00 : f32
    %342 = vector.broadcast %cst_168 : f32 to vector<2x128xf32>
    %343 = arith.addf %342, %341 : vector<2x128xf32>
    %344 = arith.divf %342, %343 : vector<2x128xf32>
    %345 = math.tanh %339 : vector<2x128xf32>
    %c96_i32_169 = arith.constant 96 : i32
    %346 = tpu.dynamic_rotate %344 by %c96_i32_169 dim 1 : vector<2x128xf32>, i32 -> vector<2x128xf32>
    %c64_i32_170 = arith.constant 64 : i32
    %347 = tpu.dynamic_rotate %345 by %c64_i32_170 dim 1 : vector<2x128xf32>, i32 -> vector<2x128xf32>
    %c32_i32_171 = arith.constant 32 : i32
    %348 = tpu.dynamic_rotate %344 by %c32_i32_171 dim 1 : vector<2x128xf32>, i32 -> vector<2x128xf32>
    %349 = arith.mulf %346, %332 : vector<2x128xf32>
    %350 = arith.mulf %344, %347 : vector<2x128xf32>
    %351 = arith.addf %349, %350 : vector<2x128xf32>
    %352 = math.tanh %351 : vector<2x128xf32>
    %353 = arith.mulf %348, %352 : vector<2x128xf32>
    %354 = vector.extract_strided_slice %353 {offsets = [0, 0], sizes = [2, 32], strides = [1, 1]} : vector<2x128xf32> to vector<2x32xf32>
    %c14_172 = arith.constant 14 : index
    %c0_173 = arith.constant 0 : index
    %355 = vector.load %arg15[%c14_172, %c0_173] : memref<16x32xf32, #tpu.memory_space<vmem>>, vector<2x32xf32>
    tpu.vector_store %arg15[%c14_172, %c0_173], %354 {strides = array<i32>} : memref<16x32xf32, #tpu.memory_space<vmem>>, vector<2x32xf32>,
    %c1_174 = arith.constant 1 : index
    %c0_175 = arith.constant 0 : index
    %c0_176 = arith.constant 0 : index
    %356 = vector.load %arg12[%c1_174, %c0_175, %c0_176] : memref<2x2x32xf32, #tpu.memory_space<vmem>>, vector<1x2x32xf32>
    %357 = vector.shape_cast %356 : vector<1x2x32xf32> to vector<2x32xf32>
    %358 = vector.shape_cast %354 : vector<2x32xf32> to vector<1x2x32xf32>
    tpu.vector_store %arg12[%c1_174, %c0_175, %c0_176], %358 {strides = array<i32>} : memref<2x2x32xf32, #tpu.memory_space<vmem>>, vector<1x2x32xf32>,
    %359 = vector.extract_strided_slice %351 {offsets = [0, 0], sizes = [2, 32], strides = [1, 1]} : vector<2x128xf32> to vector<2x32xf32>
    %c1_177 = arith.constant 1 : index
    %c0_178 = arith.constant 0 : index
    %c0_179 = arith.constant 0 : index
    %360 = vector.load %arg13[%c1_177, %c0_178, %c0_179] : memref<2x2x32xf32, #tpu.memory_space<vmem>>, vector<1x2x32xf32>
    %361 = vector.shape_cast %360 : vector<1x2x32xf32> to vector<2x32xf32>
    %362 = vector.shape_cast %359 : vector<2x32xf32> to vector<1x2x32xf32>
    tpu.vector_store %arg13[%c1_177, %c0_178, %c0_179], %362 {strides = array<i32>} : memref<2x2x32xf32, #tpu.memory_space<vmem>>, vector<1x2x32xf32>,
    %c0_180 = arith.constant 0 : index
    %c0_181 = arith.constant 0 : index
    %363 = vector.load %arg15[%c0_180, %c0_181] : memref<16x32xf32, #tpu.memory_space<vmem>>, vector<16x32xf32>
    %c0_182 = arith.constant 0 : index
    %c0_183 = arith.constant 0 : index
    %364 = vector.load %arg9[%c0_182, %c0_183] : memref<32x4xf32, #tpu.memory_space<vmem>>, vector<32x4xf32>
    %cst_184 = arith.constant dense<0.000000e+00> : vector<16x4xf32>
    %365 = tpu.matmul %363, %364, %cst_184 {dimension_numbers = #tpu.dot_dimension_numbers<[1], [0], [0], [1], [0, 0, 1, 1], [], []>} : vector<16x32xf32>, vector<32x4xf32>, vector<16x4xf32> -> vector<16x4xf32>
    %c0_185 = arith.constant 0 : index
    %c0_186 = arith.constant 0 : index
    %366 = vector.load %arg10[%c0_185, %c0_186] : memref<1x4xf32, #tpu.memory_space<vmem>>, vector<1x4xf32>
    %367 = vector.broadcast %366 : vector<1x4xf32> to vector<16x4xf32>
    %368 = arith.addf %365, %367 : vector<16x4xf32>
    %369 = vector.extract_strided_slice %368 {offsets = [0, 0], sizes = [2, 4], strides = [1, 1]} : vector<16x4xf32> to vector<2x4xf32>
    %370 = vector.extract_strided_slice %368 {offsets = [2, 0], sizes = [2, 4], strides = [1, 1]} : vector<16x4xf32> to vector<2x4xf32>
    %371 = vector.extract_strided_slice %368 {offsets = [4, 0], sizes = [2, 4], strides = [1, 1]} : vector<16x4xf32> to vector<2x4xf32>
    %372 = vector.extract_strided_slice %368 {offsets = [6, 0], sizes = [2, 4], strides = [1, 1]} : vector<16x4xf32> to vector<2x4xf32>
    %373 = vector.extract_strided_slice %368 {offsets = [8, 0], sizes = [2, 4], strides = [1, 1]} : vector<16x4xf32> to vector<2x4xf32>
    %374 = vector.extract_strided_slice %368 {offsets = [10, 0], sizes = [2, 4], strides = [1, 1]} : vector<16x4xf32> to vector<2x4xf32>
    %375 = vector.extract_strided_slice %368 {offsets = [12, 0], sizes = [2, 4], strides = [1, 1]} : vector<16x4xf32> to vector<2x4xf32>
    %376 = vector.extract_strided_slice %368 {offsets = [14, 0], sizes = [2, 4], strides = [1, 1]} : vector<16x4xf32> to vector<2x4xf32>
    %377 = vector.shape_cast %369 : vector<2x4xf32> to vector<2x1x4xf32>
    %378 = vector.shape_cast %370 : vector<2x4xf32> to vector<2x1x4xf32>
    %379 = vector.shape_cast %371 : vector<2x4xf32> to vector<2x1x4xf32>
    %380 = vector.shape_cast %372 : vector<2x4xf32> to vector<2x1x4xf32>
    %381 = vector.shape_cast %373 : vector<2x4xf32> to vector<2x1x4xf32>
    %382 = vector.shape_cast %374 : vector<2x4xf32> to vector<2x1x4xf32>
    %383 = vector.shape_cast %375 : vector<2x4xf32> to vector<2x1x4xf32>
    %384 = vector.shape_cast %376 : vector<2x4xf32> to vector<2x1x4xf32>
    %385 = tpu.concatenate %377, %378, %379, %380, %381, %382, %383, %384 in 1 : vector<2x1x4xf32>, vector<2x1x4xf32>, vector<2x1x4xf32>, vector<2x1x4xf32>, vector<2x1x4xf32>, vector<2x1x4xf32>, vector<2x1x4xf32>, vector<2x1x4xf32> -> vector<2x8x4xf32>
    %c0_187 = arith.constant 0 : index
    %c0_188 = arith.constant 0 : index
    %c0_189 = arith.constant 0 : index
    %386 = vector.load %arg11[%c0_187, %c0_188, %c0_189] : memref<2x8x4xf32, #tpu.memory_space<vmem>>, vector<2x8x4xf32>
    tpu.vector_store %arg11[%c0_187, %c0_188, %c0_189], %385 {strides = array<i32>} : memref<2x8x4xf32, #tpu.memory_space<vmem>>, vector<2x8x4xf32>,
    return
  }
}

</mosaic_0001>

<llo_original>
// kernel: net_forward.1
$region0: #{net_forward.1}
  #allocation0 [shape = 'u32[]', space=smem, size = 0x4, offset = 0x4, fixed_abs, tag = 'smem constant byte address 0x4 - core index']
  #allocation1 [shape = 'u32[144,128]{1,0:T(1,128)}', space=vmem, size = 0x12000, scoped, tag = 'internal scratch']
  #allocation2 [shape = 'f32[16,128]{1,0:T(8,128)}', space=vmem, size = 0x2000, scoped, tag = 'scratch operand']
  #allocation3 [shape = 'f32[16,32]{1,0:T(8,128)}', space=vmem, size = 0x2000, scoped, tag = 'scratch operand']
  %s0 = inlined_call_operand.hbm [shape: f32[2,8,16], index: 0, kind: input, shape index: {}]
  %s1 = inlined_call_operand.vmem [shape: f32[2,2,32], index: 1, kind: input, shape index: {}, may-alias: {1,2}]
  %s2 = inlined_call_operand.vmem [shape: f32[2,2,32], index: 2, kind: input, shape index: {}, may-alias: {1,2}]
  %s3 = inlined_call_operand.hbm [shape: f32[16,128], index: 3, kind: input, shape index: {}]
  %s4 = inlined_call_operand.vmem [shape: f32[32,128], index: 4, kind: input, shape index: {}]
  %s5 = inlined_call_operand.vmem [shape: f32[1,128], index: 5, kind: input, shape index: {}]
  %s6 = inlined_call_operand.vmem [shape: f32[32,128], index: 6, kind: input, shape index: {}]
  %s7 = inlined_call_operand.hbm [shape: f32[32,128], index: 7, kind: input, shape index: {}]
  %s8 = inlined_call_operand.vmem [shape: f32[1,128], index: 8, kind: input, shape index: {}]
  %s9 = inlined_call_operand.vmem [shape: f32[32,4], index: 9, kind: input, shape index: {}]
  %s10 = inlined_call_operand.vmem [shape: f32[1,4], index: 10, kind: input, shape index: {}]
  %s11 = inlined_call_operand.vmem [shape: f32[2,8,4], index: 11, kind: output, shape index: {0}]
  %s12 = inlined_call_operand.hbm [shape: f32[2,2,32], index: 12, kind: output, shape index: {1}]
  %s13 = inlined_call_operand.hbm [shape: f32[2,2,32], index: 13, kind: output, shape index: {2}]
  %14 = xla_tuple %s11, %s12, %s13
  %s15 = sld [smem:[#allocation0]]
  $region82: #{net_forward.1} parent=0
    _
  %s17 = ssub.s32 1, %s15
  %s18 = scalar_select 0, %s17, %s15
  $region1: #{net_forward.1} parent=0
    #allocation4 [shape = 'u8[8192]{0}', space=vmem, size = 0x2000, scoped, tag = 'input window, operand 0, single buffered']
    #allocation5 [shape = 's32[1]{0}', space=sflag, size = 0x4, scoped, tag = 'scoped memory for net_forward.1']
    #allocation6 [shape = 's32[1]{0}', space=sflag, size = 0x4, scoped, tag = 'scoped memory for net_forward.1']
    #allocation7 [shape = 'u8[8192]{0}', space=vmem, size = 0x2000, scoped, tag = 'input window, operand 3, single buffered']
    #allocation8 [shape = 's32[1]{0}', space=sflag, size = 0x4, scoped, tag = 'scoped memory for net_forward.1']
    #allocation9 [shape = 'u8[16384]{0}', space=vmem, size = 0x4000, scoped, tag = 'input window, operand 7, single buffered']
    #allocation10 [shape = 'u8[2048]{0}', space=vmem, size = 0x800, scoped, tag = 'output window, operand 1, single buffered']
    #allocation11 [shape = 'u8[2048]{0}', space=vmem, size = 0x800, scoped, tag = 'output window, operand 2, single buffered']
    #allocation12 [shape = 's32[1]{0}', space=sflag, size = 0x4, scoped, tag = 'scoped memory for net_forward.1']
    %19 = vsyncpa [#allocation5], 0
    %20 = vsyncpa [#allocation8], 0
    %21 = vsyncpa [#allocation6], 0
    %22 = vsyncpa [#allocation12], 0
    // Predicated region
    $region2: #{net_forward.1} parent=1 // pred_check
      _
    $region3: #{net_forward.1} parent=1 // pred_check_branch
      %24 = sbr.rel (0) target = $region5
    $region4: #{net_forward.1} parent=1 // pred_region
      %s26 = ssub.s32 256, 256
      %27 = vsyncadd [#allocation5], %s26
      %s28 = sshll.u32 [#allocation4], 4
      %s29 = int_to_ptr.vmem [resolvable:$true] %s28
      %34 = dma.hbm_to_vmem [thread:$0]  %s0, 256, %s29, [#allocation5], 128, 128, 8
    $region5: #{net_forward.1} parent=1 // pred_fallthru
      _
    // Predicated region
    $region6: #{net_forward.1} parent=1 // pred_check
      _
    $region7: #{net_forward.1} parent=1 // pred_check_branch
      %36 = sbr.rel (0) target = $region9
    $region8: #{net_forward.1} parent=1 // pred_region
      _
    $region9: #{net_forward.1} parent=1 // pred_fallthru
      _
    // Predicated region
    $region10: #{net_forward.1} parent=1 // pred_check
      _
    $region11: #{net_forward.1} parent=1 // pred_check_branch
      %38 = sbr.rel (0) target = $region13
    $region12: #{net_forward.1} parent=1 // pred_region
      _
    $region13: #{net_forward.1} parent=1 // pred_fallthru
      _
    // Predicated region
    $region14: #{net_forward.1} parent=1 // pred_check
      _
    $region15: #{net_forward.1} parent=1 // pred_check_branch
      %40 = sbr.rel (0) target = $region17
    $region16: #{net_forward.1} parent=1 // pred_region
      %s42 = ssub.s32 256, 256
      %43 = vsyncadd [#allocation8], %s42
      %s44 = sshll.u32 [#allocation7], 4
      %s45 = int_to_ptr.vmem [resolvable:$true] %s44
      %50 = dma.hbm_to_vmem [thread:$0]  %s3, 256, %s45, [#allocation8], 128, 128, 8
    $region17: #{net_forward.1} parent=1 // pred_fallthru
      _
    // Predicated region
    $region18: #{net_forward.1} parent=1 // pred_check
      _
    $region19: #{net_forward.1} parent=1 // pred_check_branch
      %52 = sbr.rel (0) target = $region21
    $region20: #{net_forward.1} parent=1 // pred_region
      _
    $region21: #{net_forward.1} parent=1 // pred_fallthru
      _
    // Predicated region
    $region22: #{net_forward.1} parent=1 // pred_check
      _
    $region23: #{net_forward.1} parent=1 // pred_check_branch
      %54 = sbr.rel (0) target = $region25
    $region24: #{net_forward.1} parent=1 // pred_region
      _
    $region25: #{net_forward.1} parent=1 // pred_fallthru
      _
    // Predicated region
    $region26: #{net_forward.1} parent=1 // pred_check
      _
    $region27: #{net_forward.1} parent=1 // pred_check_branch
      %56 = sbr.rel (0) target = $region29
    $region28: #{net_forward.1} parent=1 // pred_region
      _
    $region29: #{net_forward.1} parent=1 // pred_fallthru
      _
    // Predicated region
    $region30: #{net_forward.1} parent=1 // pred_check
      _
    $region31: #{net_forward.1} parent=1 // pred_check_branch
      %58 = sbr.rel (0) target = $region33
    $region32: #{net_forward.1} parent=1 // pred_region
      %s60 = ssub.s32 512, 512
      %61 = vsyncadd [#allocation8], %s60
      %s62 = sshll.u32 [#allocation9], 4
      %s63 = int_to_ptr.vmem [resolvable:$true] %s62
      %68 = dma.hbm_to_vmem [thread:$0]  %s7, 512, %s63, [#allocation8], 128, 128, 8
    $region33: #{net_forward.1} parent=1 // pred_fallthru
      _
    // Predicated region
    $region34: #{net_forward.1} parent=1 // pred_check
      _
    $region35: #{net_forward.1} parent=1 // pred_check_branch
      %70 = sbr.rel (0) target = $region37
    $region36: #{net_forward.1} parent=1 // pred_region
      _
    $region37: #{net_forward.1} parent=1 // pred_fallthru
      _
    // Predicated region
    $region38: #{net_forward.1} parent=1 // pred_check
      _
    $region39: #{net_forward.1} parent=1 // pred_check_branch
      %72 = sbr.rel (0) target = $region41
    $region40: #{net_forward.1} parent=1 // pred_region
      _
    $region41: #{net_forward.1} parent=1 // pred_fallthru
      _
    // Predicated region
    $region42: #{net_forward.1} parent=1 // pred_check
      _
    $region43: #{net_forward.1} parent=1 // pred_check_branch
      %74 = sbr.rel (0) target = $region45
    $region44: #{net_forward.1} parent=1 // pred_region
      _
    $region45: #{net_forward.1} parent=1 // pred_fallthru
      _
    // Predicated region
    $region46: #{net_forward.1} parent=1 // pred_check
      _
    $region47: #{net_forward.1} parent=1 // pred_check_branch
      %76 = sbr.rel (0) target = $region49
    $region48: #{net_forward.1} parent=1 // pred_region
      %77 = dma.done [#allocation5], 256
    $region49: #{net_forward.1} parent=1 // pred_fallthru
      _
    // Predicated region
    $region50: #{net_forward.1} parent=1 // pred_check
      _
    $region51: #{net_forward.1} parent=1 // pred_check_branch
      %79 = sbr.rel (0) target = $region53
    $region52: #{net_forward.1} parent=1 // pred_region
      %80 = dma.done [#allocation8], 256
    $region53: #{net_forward.1} parent=1 // pred_fallthru
      _
    // Predicated region
    $region54: #{net_forward.1} parent=1 // pred_check
      _
    $region55: #{net_forward.1} parent=1 // pred_check_branch
      %82 = sbr.rel (0) target = $region57
    $region56: #{net_forward.1} parent=1 // pred_region
      %83 = dma.done [#allocation8], 512
    $region57: #{net_forward.1} parent=1 // pred_fallthru
      _
    %v84 = vld [vmem:[#allocation4] sm:$0xff]
    %v85 = vld [vmem:[#allocation4 + $0x8] sm:$0xff]
    %v88 = vrot.slane %v85, 7
    %vm89 = vcmask 1041409
    %v90 = vsel %vm89, %v88, %v84
    %v92 = vrot.slane %v84, 7
    %v93 = vrot.slane %v85, 6
    %vm94 = vcmask 1043459
    %v95 = vsel %vm94, %v93, %v92
    %v97 = vrot.slane %v84, 6
    %v98 = vrot.slane %v85, 5
    %vm99 = vcmask 1045509
    %v100 = vsel %vm99, %v98, %v97
    %v102 = vrot.slane %v84, 5
    %v103 = vrot.slane %v85, 4
    %vm104 = vcmask 1047559
    %v105 = vsel %vm104, %v103, %v102
    %v107 = vrot.slane %v84, 4
    %v108 = vrot.slane %v85, 3
    %v109 = vsel %vm89, %v108, %v107
    %v111 = vrot.slane %v84, 3
    %v112 = vrot.slane %v85, 2
    %v113 = vsel %vm94, %v112, %v111
    %v115 = vrot.slane %v84, 2
    %v116 = vrot.slane %v85, 1
    %v117 = vsel %vm99, %v116, %v115
    %v119 = vrot.slane %v84, 1
    %v120 = vsel %vm104, %v85, %v119
    %vm122 = vcmask 1041408
    %v123 = vsel %vm122, %v90, %v95
    %vm124 = vcmask 1043456
    %v125 = vsel %vm124, %v123, %v100
    %vm126 = vcmask 1045504
    %v127 = vsel %vm126, %v125, %v105
    %v128 = vsel %vm122, %v109, %v113
    %v129 = vsel %vm124, %v128, %v117
    %v130 = vsel %vm126, %v129, %v120
    %v131 = vld [vmem:[#allocation7] sm:$0xff]
    %v132 = vld [vmem:[#allocation7 + $0x8] sm:$0xff]
    %v133 = vld [vmem:[%s5] sm:$0x1]
    %v135 = vlaneseq
    %v136 = vshrl.u32 %v135, 7
    %v137 = vsub.s32 0, %v136
    %v138 = vrot.slane %v133, %v137
    %vm140 = vcmask 130048
    %v142 = vsel %vm140, %v127, 0
    %v145 = vsel %vm140, %v130, 0
    %147 = vmatprep.subr.mxu0 0.0
    %148 = vmatpush1.msra.mxu0 %v131
    %149 = vmatprep.subr.mxu0 0.0
    %150 = vmatpush1.msra.mxu0 %v132
    %151 = vmatprep.subr.mxu0 0.0
    %152 = vmatpush1.msra.mxu0 0.0
    %153 = vmatprep.subr.mxu0 0.0
    %154 = vmatpush1.msra.mxu0 0.0
    %155 = vmatprep.subr.mxu0 0.0
    %156 = vmatpush1.msra.mxu0 0.0
    %157 = vmatprep.subr.mxu0 0.0
    %158 = vmatpush1.msra.mxu0 0.0
    %159 = vmatprep.subr.mxu0 0.0
    %160 = vmatpush1.msra.mxu0 0.0
    %161 = vmatprep.subr.mxu0 0.0
    %162 = vmatpush1.msra.mxu0 0.0
    %163 = vmatprep.subr.mxu0 0.0
    %164 = vmatpush1.msra.mxu0 0.0
    %165 = vmatprep.subr.mxu0 0.0
    %166 = vmatpush1.msra.mxu0 0.0
    %167 = vmatprep.subr.mxu0 0.0
    %168 = vmatpush1.msra.mxu0 0.0
    %169 = vmatprep.subr.mxu0 0.0
    %170 = vmatpush1.msra.mxu0 0.0
    %171 = vmatprep.subr.mxu0 0.0
    %172 = vmatpush1.msra.mxu0 0.0
    %173 = vmatprep.subr.mxu0 0.0
    %174 = vmatpush1.msra.mxu0 0.0
    %175 = vmatprep.subr.mxu0 0.0
    %176 = vmatpush1.msra.mxu0 0.0
    %177 = vmatprep.subr.mxu0 0.0
    %178 = vmatpush1.msra.mxu0 0.0
    %179 = vmatprep.subr.mxu0 0.0
    %180 = vmatpush1.msra.mxu0 0.0
    %181 = vmatprep.subr.mxu0 0.0
    %182 = vmatpush1.msra.mxu0 0.0
    %183 = vmatprep.subr.mxu0 0.0
    %184 = vmatpush1.msra.mxu0 0.0
    %185 = vmatprep.subr.mxu0 0.0
    %186 = vmatpush1.msra.mxu0 0.0
    %187 = vmatprep.subr.mxu0 0.0
    %188 = vmatpush1.msra.mxu0 0.0
    %189 = vmatprep.subr.mxu0 0.0
    %190 = vmatpush1.msra.mxu0 0.0
    %191 = vmatprep.subr.mxu0 0.0
    %192 = vmatpush1.msra.mxu0 0.0
    %193 = vmatprep.subr.mxu0 0.0
    %194 = vmatpush1.msra.mxu0 0.0
    %195 = vmatprep.subr.mxu0 0.0
    %196 = vmatpush1.msra.mxu0 0.0
    %197 = vmatprep.subr.mxu0 0.0
    %198 = vmatpush1.msra.mxu0 0.0
    %199 = vmatprep.subr.mxu0 0.0
    %200 = vmatpush1.msra.mxu0 0.0
    %201 = vmatprep.subr.mxu0 0.0
    %202 = vmatpush1.msra.mxu0 0.0
    %203 = vmatprep.subr.mxu0 0.0
    %204 = vmatpush1.msra.mxu0 0.0
    %205 = vmatprep.subr.mxu0 0.0
    %206 = vmatpush1.msra.mxu0 0.0
    %207 = vmatprep.subr.mxu0 0.0
    %208 = vmatpush1.msra.mxu0 0.0
    %209 = vmatprep.subr.mxu0 0.0
    %210 = vmatpush1.msra.mxu0 0.0
    %211 = vmatprep.mubr.f32.mxu0 0.0
    %212 = vmatmul.mubr.f32.gmra.mrb[0].mxu0 %v142
    %v213 = vpop.f32.mrb[0].mxu0
    %v214 = vadd.f32 %v138, %v213
    %v215 = vpop.f32.mrb[0].mxu0
    %216 = vmatprep.mubr.f32.mxu0 0.0
    %217 = vmatmul.mubr.f32.gmra.mrb[0].mxu0 %v145
    %v218 = vpop.f32.mrb[0].mxu0
    %v219 = vadd.f32 %v138, %v218
    %v220 = vpop.f32.mrb[0].mxu0
    %221 = vdwg.mxu0
    %222 = vst [vmem:[#allocation2] sm:$0xff] %v214
    %223 = vst [vmem:[#allocation2 + $0x8] sm:$0xff] %v219
    %v224 = vld [vmem:[%s4] sm:$0xff]
    %v225 = vld [vmem:[%s4 + $0x8] sm:$0xff]
    %v226 = vld [vmem:[%s4 + $0x10] sm:$0xff]
    %v227 = vld [vmem:[%s4 + $0x18] sm:$0xff]
    %v228 = vld [vmem:[%s1] sm:$0x3]
    %v229 = vld [vmem:[%s2] sm:$0x3]
    %vm230 = vcmask 261120
    %v231 = vsel %vm230, %v229, 0.0
    %v232 = vld [vmem:[#allocation2] sm:$0x3]
    %v234 = vsel %vm230, %v228, 0
    %236 = vmatprep.subr.mxu0 0.0
    %237 = vmatpush1.msra.mxu0 %v224
    %238 = vmatprep.subr.mxu0 0.0
    %239 = vmatpush1.msra.mxu0 %v225
    %240 = vmatprep.subr.mxu0 0.0
    %241 = vmatpush1.msra.mxu0 %v226
    %242 = vmatprep.subr.mxu0 0.0
    %243 = vmatpush1.msra.mxu0 %v227
    %244 = vmatprep.subr.mxu0 0.0
    %245 = vmatpush1.msra.mxu0 0.0
    %246 = vmatprep.subr.mxu0 0.0
    %247 = vmatpush1.msra.mxu0 0.0
    %248 = vmatprep.subr.mxu0 0.0
    %249 = vmatpush1.msra.mxu0 0.0
    %250 = vmatprep.subr.mxu0 0.0
    %251 = vmatpush1.msra.mxu0 0.0
    %252 = vmatprep.subr.mxu0 0.0
    %253 = vmatpush1.msra.mxu0 0.0
    %254 = vmatprep.subr.mxu0 0.0
    %255 = vmatpush1.msra.mxu0 0.0
    %256 = vmatprep.subr.mxu0 0.0
    %257 = vmatpush1.msra.mxu0 0.0
    %258 = vmatprep.subr.mxu0 0.0
    %259 = vmatpush1.msra.mxu0 0.0
    %260 = vmatprep.subr.mxu0 0.0
    %261 = vmatpush1.msra.mxu0 0.0
    %262 = vmatprep.subr.mxu0 0.0
    %263 = vmatpush1.msra.mxu0 0.0
    %264 = vmatprep.subr.mxu0 0.0
    %265 = vmatpush1.msra.mxu0 0.0
    %266 = vmatprep.subr.mxu0 0.0
    %267 = vmatpush1.msra.mxu0 0.0
    %268 = vmatprep.subr.mxu0 0.0
    %269 = vmatpush1.msra.mxu0 0.0
    %270 = vmatprep.subr.mxu0 0.0
    %271 = vmatpush1.msra.mxu0 0.0
    %272 = vmatprep.subr.mxu0 0.0
    %273 = vmatpush1.msra.mxu0 0.0
    %274 = vmatprep.subr.mxu0 0.0
    %275 = vmatpush1.msra.mxu0 0.0
    %276 = vmatprep.subr.mxu0 0.0
    %277 = vmatpush1.msra.mxu0 0.0
    %278 = vmatprep.subr.mxu0 0.0
    %279 = vmatpush1.msra.mxu0 0.0
    %280 = vmatprep.subr.mxu0 0.0
    %281 = vmatpush1.msra.mxu0 0.0
    %282 = vmatprep.subr.mxu0 0.0
    %283 = vmatpush1.msra.mxu0 0.0
    %284 = vmatprep.subr.mxu0 0.0
    %285 = vmatpush1.msra.mxu0 0.0
    %286 = vmatprep.subr.mxu0 0.0
    %287 = vmatpush1.msra.mxu0 0.0
    %288 = vmatprep.subr.mxu0 0.0
    %289 = vmatpush1.msra.mxu0 0.0
    %290 = vmatprep.subr.mxu0 0.0
    %291 = vmatpush1.msra.mxu0 0.0
    %292 = vmatprep.subr.mxu0 0.0
    %293 = vmatpush1.msra.mxu0 0.0
    %294 = vmatprep.subr.mxu0 0.0
    %295 = vmatpush1.msra.mxu0 0.0
    %296 = vmatprep.subr.mxu0 0.0
    %297 = vmatpush1.msra.mxu0 0.0
    %298 = vmatprep.subr.mxu0 0.0
    %299 = vmatpush1.msra.mxu0 0.0
    %300 = vmatprep.mubr.f32.mxu0 0.0
    %301 = vmatmul.mubr.f32.gmra.mrb[0].mxu0 %v234
    %v302 = vpop.f32.mrb[0].mxu0
    %v303 = vadd.f32 0.0, %v302
    %v304 = vpop.f32.mrb[0].mxu0
    %305 = vdwg.mxu0
    %v306 = vadd.f32 %v232, %v303
    %v307 = vxor.u32 %v306, 2147483648
    %v308 = vmul.f32 %v307, 1.442695
    %v309 = vpow.pop %v308
    %v310 = vadd.f32 %v309, 1.0
    %v311 = vrcp.pop %v310
    %v312 = vmul.f32 1.0, %v311
    %v313 = vtanh.pop %v306
    %314 = vrot.lane.b32.xlu0 %v312, 96
    %v315 = vpop.permute.xlu0 %314
    %316 = vrot.lane.b32.xlu0 %v313, 64
    %v317 = vpop.permute.xlu0 %316
    %318 = vrot.lane.b32.xlu0 %v312, 32
    %v319 = vpop.permute.xlu0 %318
    %v320 = vmul.f32 %v315, %v231
    %v321 = vmul.f32 %v312, %v317
    %v322 = vadd.f32 %v320, %v321
    %v323 = vtanh.pop %v322
    %v324 = vmul.f32 %v319, %v323
    %vm325 = vcmask 254976
    %326 = vst.msk [vmem:[#allocation3] sm:$0x3] %vm325, %v324
    %v327 = vld [vmem:[#allocation2 + $0x2] sm:$0x3]
    %v329 = vsel %vm230, %v324, 0
    %331 = vmatprep.subr.mxu0 0.0
    %332 = vmatpush1.msra.mxu0 %v224
    %333 = vmatprep.subr.mxu0 0.0
    %334 = vmatpush1.msra.mxu0 %v225
    %335 = vmatprep.subr.mxu0 0.0
    %336 = vmatpush1.msra.mxu0 %v226
    %337 = vmatprep.subr.mxu0 0.0
    %338 = vmatpush1.msra.mxu0 %v227
    %339 = vmatprep.subr.mxu0 0.0
    %340 = vmatpush1.msra.mxu0 0.0
    %341 = vmatprep.subr.mxu0 0.0
    %342 = vmatpush1.msra.mxu0 0.0
    %343 = vmatprep.subr.mxu0 0.0
    %344 = vmatpush1.msra.mxu0 0.0
    %345 = vmatprep.subr.mxu0 0.0
    %346 = vmatpush1.msra.mxu0 0.0
    %347 = vmatprep.subr.mxu0 0.0
    %348 = vmatpush1.msra.mxu0 0.0
    %349 = vmatprep.subr.mxu0 0.0
    %350 = vmatpush1.msra.mxu0 0.0
    %351 = vmatprep.subr.mxu0 0.0
    %352 = vmatpush1.msra.mxu0 0.0
    %353 = vmatprep.subr.mxu0 0.0
    %354 = vmatpush1.msra.mxu0 0.0
    %355 = vmatprep.subr.mxu0 0.0
    %356 = vmatpush1.msra.mxu0 0.0
    %357 = vmatprep.subr.mxu0 0.0
    %358 = vmatpush1.msra.mxu0 0.0
    %359 = vmatprep.subr.mxu0 0.0
    %360 = vmatpush1.msra.mxu0 0.0
    %361 = vmatprep.subr.mxu0 0.0
    %362 = vmatpush1.msra.mxu0 0.0
    %363 = vmatprep.subr.mxu0 0.0
    %364 = vmatpush1.msra.mxu0 0.0
    %365 = vmatprep.subr.mxu0 0.0
    %366 = vmatpush1.msra.mxu0 0.0
    %367 = vmatprep.subr.mxu0 0.0
    %368 = vmatpush1.msra.mxu0 0.0
    %369 = vmatprep.subr.mxu0 0.0
    %370 = vmatpush1.msra.mxu0 0.0
    %371 = vmatprep.subr.mxu0 0.0
    %372 = vmatpush1.msra.mxu0 0.0
    %373 = vmatprep.subr.mxu0 0.0
    %374 = vmatpush1.msra.mxu0 0.0
    %375 = vmatprep.subr.mxu0 0.0
    %376 = vmatpush1.msra.mxu0 0.0
    %377 = vmatprep.subr.mxu0 0.0
    %378 = vmatpush1.msra.mxu0 0.0
    %379 = vmatprep.subr.mxu0 0.0
    %380 = vmatpush1.msra.mxu0 0.0
    %381 = vmatprep.subr.mxu0 0.0
    %382 = vmatpush1.msra.mxu0 0.0
    %383 = vmatprep.subr.mxu0 0.0
    %384 = vmatpush1.msra.mxu0 0.0
    %385 = vmatprep.subr.mxu0 0.0
    %386 = vmatpush1.msra.mxu0 0.0
    %387 = vmatprep.subr.mxu0 0.0
    %388 = vmatpush1.msra.mxu0 0.0
    %389 = vmatprep.subr.mxu0 0.0
    %390 = vmatpush1.msra.mxu0 0.0
    %391 = vmatprep.subr.mxu0 0.0
    %392 = vmatpush1.msra.mxu0 0.0
    %393 = vmatprep.subr.mxu0 0.0
    %394 = vmatpush1.msra.mxu0 0.0
    %395 = vmatprep.mubr.f32.mxu0 0.0
    %396 = vmatmul.mubr.f32.gmra.mrb[0].mxu0 %v329
    %v397 = vpop.f32.mrb[0].mxu0
    %v398 = vadd.f32 0.0, %v397
    %v399 = vpop.f32.mrb[0].mxu0
    %400 = vdwg.mxu0
    %v401 = vadd.f32 %v327, %v398
    %v402 = vxor.u32 %v401, 2147483648
    %v403 = vmul.f32 %v402, 1.442695
    %v404 = vpow.pop %v403
    %v405 = vadd.f32 %v404, 1.0
    %v406 = vrcp.pop %v405
    %v407 = vmul.f32 1.0, %v406
    %v408 = vtanh.pop %v401
    %409 = vrot.lane.b32.xlu0 %v407, 96
    %v410 = vpop.permute.xlu0 %409
    %411 = vrot.lane.b32.xlu0 %v408, 64
    %v412 = vpop.permute.xlu0 %411
    %413 = vrot.lane.b32.xlu0 %v407, 32
    %v414 = vpop.permute.xlu0 %413
    %v415 = vmul.f32 %v410, %v322
    %v416 = vmul.f32 %v407, %v412
    %v417 = vadd.f32 %v415, %v416
    %v418 = vtanh.pop %v417
    %v419 = vmul.f32 %v414, %v418
    %420 = vst.msk [vmem:[#allocation3 + $0x2] sm:$0x3] %vm325, %v419
    %v421 = vld [vmem:[#allocation2 + $0x4] sm:$0x3]
    %v423 = vsel %vm230, %v419, 0
    %425 = vmatprep.subr.mxu0 0.0
    %426 = vmatpush1.msra.mxu0 %v224
    %427 = vmatprep.subr.mxu0 0.0
    %428 = vmatpush1.msra.mxu0 %v225
    %429 = vmatprep.subr.mxu0 0.0
    %430 = vmatpush1.msra.mxu0 %v226
    %431 = vmatprep.subr.mxu0 0.0
    %432 = vmatpush1.msra.mxu0 %v227
    %433 = vmatprep.subr.mxu0 0.0
    %434 = vmatpush1.msra.mxu0 0.0
    %435 = vmatprep.subr.mxu0 0.0
    %436 = vmatpush1.msra.mxu0 0.0
    %437 = vmatprep.subr.mxu0 0.0
    %438 = vmatpush1.msra.mxu0 0.0
    %439 = vmatprep.subr.mxu0 0.0
    %440 = vmatpush1.msra.mxu0 0.0
    %441 = vmatprep.subr.mxu0 0.0
    %442 = vmatpush1.msra.mxu0 0.0
    %443 = vmatprep.subr.mxu0 0.0
    %444 = vmatpush1.msra.mxu0 0.0
    %445 = vmatprep.subr.mxu0 0.0
    %446 = vmatpush1.msra.mxu0 0.0
    %447 = vmatprep.subr.mxu0 0.0
    %448 = vmatpush1.msra.mxu0 0.0
    %449 = vmatprep.subr.mxu0 0.0
    %450 = vmatpush1.msra.mxu0 0.0
    %451 = vmatprep.subr.mxu0 0.0
    %452 = vmatpush1.msra.mxu0 0.0
    %453 = vmatprep.subr.mxu0 0.0
    %454 = vmatpush1.msra.mxu0 0.0
    %455 = vmatprep.subr.mxu0 0.0
    %456 = vmatpush1.msra.mxu0 0.0
    %457 = vmatprep.subr.mxu0 0.0
    %458 = vmatpush1.msra.mxu0 0.0
    %459 = vmatprep.subr.mxu0 0.0
    %460 = vmatpush1.msra.mxu0 0.0
    %461 = vmatprep.subr.mxu0 0.0
    %462 = vmatpush1.msra.mxu0 0.0
    %463 = vmatprep.subr.mxu0 0.0
    %464 = vmatpush1.msra.mxu0 0.0
    %465 = vmatprep.subr.mxu0 0.0
    %466 = vmatpush1.msra.mxu0 0.0
    %467 = vmatprep.subr.mxu0 0.0
    %468 = vmatpush1.msra.mxu0 0.0
    %469 = vmatprep.subr.mxu0 0.0
    %470 = vmatpush1.msra.mxu0 0.0
    %471 = vmatprep.subr.mxu0 0.0
    %472 = vmatpush1.msra.mxu0 0.0
    %473 = vmatprep.subr.mxu0 0.0
    %474 = vmatpush1.msra.mxu0 0.0
    %475 = vmatprep.subr.mxu0 0.0
    %476 = vmatpush1.msra.mxu0 0.0
    %477 = vmatprep.subr.mxu0 0.0
    %478 = vmatpush1.msra.mxu0 0.0
    %479 = vmatprep.subr.mxu0 0.0
    %480 = vmatpush1.msra.mxu0 0.0
    %481 = vmatprep.subr.mxu0 0.0
    %482 = vmatpush1.msra.mxu0 0.0
    %483 = vmatprep.subr.mxu0 0.0
    %484 = vmatpush1.msra.mxu0 0.0
    %485 = vmatprep.subr.mxu0 0.0
    %486 = vmatpush1.msra.mxu0 0.0
    %487 = vmatprep.subr.mxu0 0.0
    %488 = vmatpush1.msra.mxu0 0.0
    %489 = vmatprep.mubr.f32.mxu0 0.0
    %490 = vmatmul.mubr.f32.gmra.mrb[0].mxu0 %v423
    %v491 = vpop.f32.mrb[0].mxu0
    %v492 = vadd.f32 0.0, %v491
    %v493 = vpop.f32.mrb[0].mxu0
    %494 = vdwg.mxu0
    %v495 = vadd.f32 %v421, %v492
    %v496 = vxor.u32 %v495, 2147483648
    %v497 = vmul.f32 %v496, 1.442695
    %v498 = vpow.pop %v497
    %v499 = vadd.f32 %v498, 1.0
    %v500 = vrcp.pop %v499
    %v501 = vmul.f32 1.0, %v500
    %v502 = vtanh.pop %v495
    %503 = vrot.lane.b32.xlu0 %v501, 96
    %v504 = vpop.permute.xlu0 %503
    %505 = vrot.lane.b32.xlu0 %v502, 64
    %v506 = vpop.permute.xlu0 %505
    %507 = vrot.lane.b32.xlu0 %v501, 32
    %v508 = vpop.permute.xlu0 %507
    %v509 = vmul.f32 %v504, %v417
    %v510 = vmul.f32 %v501, %v506
    %v511 = vadd.f32 %v509, %v510
    %v512 = vtanh.pop %v511
    %v513 = vmul.f32 %v508, %v512
    %514 = vst.msk [vmem:[#allocation3 + $0x4] sm:$0x3] %vm325, %v513
    %v515 = vld [vmem:[#allocation2 + $0x6] sm:$0x3]
    %v517 = vsel %vm230, %v513, 0
    %519 = vmatprep.subr.mxu0 0.0
    %520 = vmatpush1.msra.mxu0 %v224
    %521 = vmatprep.subr.mxu0 0.0
    %522 = vmatpush1.msra.mxu0 %v225
    %523 = vmatprep.subr.mxu0 0.0
    %524 = vmatpush1.msra.mxu0 %v226
    %525 = vmatprep.subr.mxu0 0.0
    %526 = vmatpush1.msra.mxu0 %v227
    %527 = vmatprep.subr.mxu0 0.0
    %528 = vmatpush1.msra.mxu0 0.0
    %529 = vmatprep.subr.mxu0 0.0
    %530 = vmatpush1.msra.mxu0 0.0
    %531 = vmatprep.subr.mxu0 0.0
    %532 = vmatpush1.msra.mxu0 0.0
    %533 = vmatprep.subr.mxu0 0.0
    %534 = vmatpush1.msra.mxu0 0.0
    %535 = vmatprep.subr.mxu0 0.0
    %536 = vmatpush1.msra.mxu0 0.0
    %537 = vmatprep.subr.mxu0 0.0
    %538 = vmatpush1.msra.mxu0 0.0
    %539 = vmatprep.subr.mxu0 0.0
    %540 = vmatpush1.msra.mxu0 0.0
    %541 = vmatprep.subr.mxu0 0.0
    %542 = vmatpush1.msra.mxu0 0.0
    %543 = vmatprep.subr.mxu0 0.0
    %544 = vmatpush1.msra.mxu0 0.0
    %545 = vmatprep.subr.mxu0 0.0
    %546 = vmatpush1.msra.mxu0 0.0
    %547 = vmatprep.subr.mxu0 0.0
    %548 = vmatpush1.msra.mxu0 0.0
    %549 = vmatprep.subr.mxu0 0.0
    %550 = vmatpush1.msra.mxu0 0.0
    %551 = vmatprep.subr.mxu0 0.0
    %552 = vmatpush1.msra.mxu0 0.0
    %553 = vmatprep.subr.mxu0 0.0
    %554 = vmatpush1.msra.mxu0 0.0
    %555 = vmatprep.subr.mxu0 0.0
    %556 = vmatpush1.msra.mxu0 0.0
    %557 = vmatprep.subr.mxu0 0.0
    %558 = vmatpush1.msra.mxu0 0.0
    %559 = vmatprep.subr.mxu0 0.0
    %560 = vmatpush1.msra.mxu0 0.0
    %561 = vmatprep.subr.mxu0 0.0
    %562 = vmatpush1.msra.mxu0 0.0
    %563 = vmatprep.subr.mxu0 0.0
    %564 = vmatpush1.msra.mxu0 0.0
    %565 = vmatprep.subr.mxu0 0.0
    %566 = vmatpush1.msra.mxu0 0.0
    %567 = vmatprep.subr.mxu0 0.0
    %568 = vmatpush1.msra.mxu0 0.0
    %569 = vmatprep.subr.mxu0 0.0
    %570 = vmatpush1.msra.mxu0 0.0
    %571 = vmatprep.subr.mxu0 0.0
    %572 = vmatpush1.msra.mxu0 0.0
    %573 = vmatprep.subr.mxu0 0.0
    %574 = vmatpush1.msra.mxu0 0.0
    %575 = vmatprep.subr.mxu0 0.0
    %576 = vmatpush1.msra.mxu0 0.0
    %577 = vmatprep.subr.mxu0 0.0
    %578 = vmatpush1.msra.mxu0 0.0
    %579 = vmatprep.subr.mxu0 0.0
    %580 = vmatpush1.msra.mxu0 0.0
    %581 = vmatprep.subr.mxu0 0.0
    %582 = vmatpush1.msra.mxu0 0.0
    %583 = vmatprep.mubr.f32.mxu0 0.0
    %584 = vmatmul.mubr.f32.gmra.mrb[0].mxu0 %v517
    %v585 = vpop.f32.mrb[0].mxu0
    %v586 = vadd.f32 0.0, %v585
    %v587 = vpop.f32.mrb[0].mxu0
    %588 = vdwg.mxu0
    %v589 = vadd.f32 %v515, %v586
    %v590 = vxor.u32 %v589, 2147483648
    %v591 = vmul.f32 %v590, 1.442695
    %v592 = vpow.pop %v591
    %v593 = vadd.f32 %v592, 1.0
    %v594 = vrcp.pop %v593
    %v595 = vmul.f32 1.0, %v594
    %v596 = vtanh.pop %v589
    %597 = vrot.lane.b32.xlu0 %v595, 96
    %v598 = vpop.permute.xlu0 %597
    %599 = vrot.lane.b32.xlu0 %v596, 64
    %v600 = vpop.permute.xlu0 %599
    %601 = vrot.lane.b32.xlu0 %v595, 32
    %v602 = vpop.permute.xlu0 %601
    %v603 = vmul.f32 %v598, %v511
    %v604 = vmul.f32 %v595, %v600
    %v605 = vadd.f32 %v603, %v604
    %v606 = vtanh.pop %v605
    %v607 = vmul.f32 %v602, %v606
    %608 = vst.msk [vmem:[#allocation3 + $0x6] sm:$0x3] %vm325, %v607
    %v609 = vld [vmem:[#allocation2 + $0x8] sm:$0x3]
    %v611 = vsel %vm230, %v607, 0
    %613 = vmatprep.subr.mxu0 0.0
    %614 = vmatpush1.msra.mxu0 %v224
    %615 = vmatprep.subr.mxu0 0.0
    %616 = vmatpush1.msra.mxu0 %v225
    %617 = vmatprep.subr.mxu0 0.0
    %618 = vmatpush1.msra.mxu0 %v226
    %619 = vmatprep.subr.mxu0 0.0
    %620 = vmatpush1.msra.mxu0 %v227
    %621 = vmatprep.subr.mxu0 0.0
    %622 = vmatpush1.msra.mxu0 0.0
    %623 = vmatprep.subr.mxu0 0.0
    %624 = vmatpush1.msra.mxu0 0.0
    %625 = vmatprep.subr.mxu0 0.0
    %626 = vmatpush1.msra.mxu0 0.0
    %627 = vmatprep.subr.mxu0 0.0
    %628 = vmatpush1.msra.mxu0 0.0
    %629 = vmatprep.subr.mxu0 0.0
    %630 = vmatpush1.msra.mxu0 0.0
    %631 = vmatprep.subr.mxu0 0.0
    %632 = vmatpush1.msra.mxu0 0.0
    %633 = vmatprep.subr.mxu0 0.0
    %634 = vmatpush1.msra.mxu0 0.0
    %635 = vmatprep.subr.mxu0 0.0
    %636 = vmatpush1.msra.mxu0 0.0
    %637 = vmatprep.subr.mxu0 0.0
    %638 = vmatpush1.msra.mxu0 0.0
    %639 = vmatprep.subr.mxu0 0.0
    %640 = vmatpush1.msra.mxu0 0.0
    %641 = vmatprep.subr.mxu0 0.0
    %642 = vmatpush1.msra.mxu0 0.0
    %643 = vmatprep.subr.mxu0 0.0
    %644 = vmatpush1.msra.mxu0 0.0
    %645 = vmatprep.subr.mxu0 0.0
    %646 = vmatpush1.msra.mxu0 0.0
    %647 = vmatprep.subr.mxu0 0.0
    %648 = vmatpush1.msra.mxu0 0.0
    %649 = vmatprep.subr.mxu0 0.0
    %650 = vmatpush1.msra.mxu0 0.0
    %651 = vmatprep.subr.mxu0 0.0
    %652 = vmatpush1.msra.mxu0 0.0
    %653 = vmatprep.subr.mxu0 0.0
    %654 = vmatpush1.msra.mxu0 0.0
    %655 = vmatprep.subr.mxu0 0.0
    %656 = vmatpush1.msra.mxu0 0.0
    %657 = vmatprep.subr.mxu0 0.0
    %658 = vmatpush1.msra.mxu0 0.0
    %659 = vmatprep.subr.mxu0 0.0
    %660 = vmatpush1.msra.mxu0 0.0
    %661 = vmatprep.subr.mxu0 0.0
    %662 = vmatpush1.msra.mxu0 0.0
    %663 = vmatprep.subr.mxu0 0.0
    %664 = vmatpush1.msra.mxu0 0.0
    %665 = vmatprep.subr.mxu0 0.0
    %666 = vmatpush1.msra.mxu0 0.0
    %667 = vmatprep.subr.mxu0 0.0
    %668 = vmatpush1.msra.mxu0 0.0
    %669 = vmatprep.subr.mxu0 0.0
    %670 = vmatpush1.msra.mxu0 0.0
    %671 = vmatprep.subr.mxu0 0.0
    %672 = vmatpush1.msra.mxu0 0.0
    %673 = vmatprep.subr.mxu0 0.0
    %674 = vmatpush1.msra.mxu0 0.0
    %675 = vmatprep.subr.mxu0 0.0
    %676 = vmatpush1.msra.mxu0 0.0
    %677 = vmatprep.mubr.f32.mxu0 0.0
    %678 = vmatmul.mubr.f32.gmra.mrb[0].mxu0 %v611
    %v679 = vpop.f32.mrb[0].mxu0
    %v680 = vadd.f32 0.0, %v679
    %v681 = vpop.f32.mrb[0].mxu0
    %682 = vdwg.mxu0
    %v683 = vadd.f32 %v609, %v680
    %v684 = vxor.u32 %v683, 2147483648
    %v685 = vmul.f32 %v684, 1.442695
    %v686 = vpow.pop %v685
    %v687 = vadd.f32 %v686, 1.0
    %v688 = vrcp.pop %v687
    %v689 = vmul.f32 1.0, %v688
    %v690 = vtanh.pop %v683
    %691 = vrot.lane.b32.xlu0 %v689, 96
    %v692 = vpop.permute.xlu0 %691
    %693 = vrot.lane.b32.xlu0 %v690, 64
    %v694 = vpop.permute.xlu0 %693
    %695 = vrot.lane.b32.xlu0 %v689, 32
    %v696 = vpop.permute.xlu0 %695
    %v697 = vmul.f32 %v692, %v605
    %v698 = vmul.f32 %v689, %v694
    %v699 = vadd.f32 %v697, %v698
    %v700 = vtanh.pop %v699
    %v701 = vmul.f32 %v696, %v700
    %702 = vst.msk [vmem:[#allocation3 + $0x8] sm:$0x3] %vm325, %v701
    %v703 = vld [vmem:[#allocation2 + $0xa] sm:$0x3]
    %v705 = vsel %vm230, %v701, 0
    %707 = vmatprep.subr.mxu0 0.0
    %708 = vmatpush1.msra.mxu0 %v224
    %709 = vmatprep.subr.mxu0 0.0
    %710 = vmatpush1.msra.mxu0 %v225
    %711 = vmatprep.subr.mxu0 0.0
    %712 = vmatpush1.msra.mxu0 %v226
    %713 = vmatprep.subr.mxu0 0.0
    %714 = vmatpush1.msra.mxu0 %v227
    %715 = vmatprep.subr.mxu0 0.0
    %716 = vmatpush1.msra.mxu0 0.0
    %717 = vmatprep.subr.mxu0 0.0
    %718 = vmatpush1.msra.mxu0 0.0
    %719 = vmatprep.subr.mxu0 0.0
    %720 = vmatpush1.msra.mxu0 0.0
    %721 = vmatprep.subr.mxu0 0.0
    %722 = vmatpush1.msra.mxu0 0.0
    %723 = vmatprep.subr.mxu0 0.0
    %724 = vmatpush1.msra.mxu0 0.0
    %725 = vmatprep.subr.mxu0 0.0
    %726 = vmatpush1.msra.mxu0 0.0
    %727 = vmatprep.subr.mxu0 0.0
    %728 = vmatpush1.msra.mxu0 0.0
    %729 = vmatprep.subr.mxu0 0.0
    %730 = vmatpush1.msra.mxu0 0.0
    %731 = vmatprep.subr.mxu0 0.0
    %732 = vmatpush1.msra.mxu0 0.0
    %733 = vmatprep.subr.mxu0 0.0
    %734 = vmatpush1.msra.mxu0 0.0
    %735 = vmatprep.subr.mxu0 0.0
    %736 = vmatpush1.msra.mxu0 0.0
    %737 = vmatprep.subr.mxu0 0.0
    %738 = vmatpush1.msra.mxu0 0.0
    %739 = vmatprep.subr.mxu0 0.0
    %740 = vmatpush1.msra.mxu0 0.0
    %741 = vmatprep.subr.mxu0 0.0
    %742 = vmatpush1.msra.mxu0 0.0
    %743 = vmatprep.subr.mxu0 0.0
    %744 = vmatpush1.msra.mxu0 0.0
    %745 = vmatprep.subr.mxu0 0.0
    %746 = vmatpush1.msra.mxu0 0.0
    %747 = vmatprep.subr.mxu0 0.0
    %748 = vmatpush1.msra.mxu0 0.0
    %749 = vmatprep.subr.mxu0 0.0
    %750 = vmatpush1.msra.mxu0 0.0
    %751 = vmatprep.subr.mxu0 0.0
    %752 = vmatpush1.msra.mxu0 0.0
    %753 = vmatprep.subr.mxu0 0.0
    %754 = vmatpush1.msra.mxu0 0.0
    %755 = vmatprep.subr.mxu0 0.0
    %756 = vmatpush1.msra.mxu0 0.0
    %757 = vmatprep.subr.mxu0 0.0
    %758 = vmatpush1.msra.mxu0 0.0
    %759 = vmatprep.subr.mxu0 0.0
    %760 = vmatpush1.msra.mxu0 0.0
    %761 = vmatprep.subr.mxu0 0.0
    %762 = vmatpush1.msra.mxu0 0.0
    %763 = vmatprep.subr.mxu0 0.0
    %764 = vmatpush1.msra.mxu0 0.0
    %765 = vmatprep.subr.mxu0 0.0
    %766 = vmatpush1.msra.mxu0 0.0
    %767 = vmatprep.subr.mxu0 0.0
    %768 = vmatpush1.msra.mxu0 0.0
    %769 = vmatprep.subr.mxu0 0.0
    %770 = vmatpush1.msra.mxu0 0.0
    %771 = vmatprep.mubr.f32.mxu0 0.0
    %772 = vmatmul.mubr.f32.gmra.mrb[0].mxu0 %v705
    %v773 = vpop.f32.mrb[0].mxu0
    %v774 = vadd.f32 0.0, %v773
    %v775 = vpop.f32.mrb[0].mxu0
    %776 = vdwg.mxu0
    %v777 = vadd.f32 %v703, %v774
    %v778 = vxor.u32 %v777, 2147483648
    %v779 = vmul.f32 %v778, 1.442695
    %v780 = vpow.pop %v779
    %v781 = vadd.f32 %v780, 1.0
    %v782 = vrcp.pop %v781
    %v783 = vmul.f32 1.0, %v782
    %v784 = vtanh.pop %v777
    %785 = vrot.lane.b32.xlu0 %v783, 96
    %v786 = vpop.permute.xlu0 %785
    %787 = vrot.lane.b32.xlu0 %v784, 64
    %v788 = vpop.permute.xlu0 %787
    %789 = vrot.lane.b32.xlu0 %v783, 32
    %v790 = vpop.permute.xlu0 %789
    %v791 = vmul.f32 %v786, %v699
    %v792 = vmul.f32 %v783, %v788
    %v793 = vadd.f32 %v791, %v792
    %v794 = vtanh.pop %v793
    %v795 = vmul.f32 %v790, %v794
    %796 = vst.msk [vmem:[#allocation3 + $0xa] sm:$0x3] %vm325, %v795
    %v797 = vld [vmem:[#allocation2 + $0xc] sm:$0x3]
    %v799 = vsel %vm230, %v795, 0
    %801 = vmatprep.subr.mxu0 0.0
    %802 = vmatpush1.msra.mxu0 %v224
    %803 = vmatprep.subr.mxu0 0.0
    %804 = vmatpush1.msra.mxu0 %v225
    %805 = vmatprep.subr.mxu0 0.0
    %806 = vmatpush1.msra.mxu0 %v226
    %807 = vmatprep.subr.mxu0 0.0
    %808 = vmatpush1.msra.mxu0 %v227
    %809 = vmatprep.subr.mxu0 0.0
    %810 = vmatpush1.msra.mxu0 0.0
    %811 = vmatprep.subr.mxu0 0.0
    %812 = vmatpush1.msra.mxu0 0.0
    %813 = vmatprep.subr.mxu0 0.0
    %814 = vmatpush1.msra.mxu0 0.0
    %815 = vmatprep.subr.mxu0 0.0
    %816 = vmatpush1.msra.mxu0 0.0
    %817 = vmatprep.subr.mxu0 0.0
    %818 = vmatpush1.msra.mxu0 0.0
    %819 = vmatprep.subr.mxu0 0.0
    %820 = vmatpush1.msra.mxu0 0.0
    %821 = vmatprep.subr.mxu0 0.0
    %822 = vmatpush1.msra.mxu0 0.0
    %823 = vmatprep.subr.mxu0 0.0
    %824 = vmatpush1.msra.mxu0 0.0
    %825 = vmatprep.subr.mxu0 0.0
    %826 = vmatpush1.msra.mxu0 0.0
    %827 = vmatprep.subr.mxu0 0.0
    %828 = vmatpush1.msra.mxu0 0.0
    %829 = vmatprep.subr.mxu0 0.0
    %830 = vmatpush1.msra.mxu0 0.0
    %831 = vmatprep.subr.mxu0 0.0
    %832 = vmatpush1.msra.mxu0 0.0
    %833 = vmatprep.subr.mxu0 0.0
    %834 = vmatpush1.msra.mxu0 0.0
    %835 = vmatprep.subr.mxu0 0.0
    %836 = vmatpush1.msra.mxu0 0.0
    %837 = vmatprep.subr.mxu0 0.0
    %838 = vmatpush1.msra.mxu0 0.0
    %839 = vmatprep.subr.mxu0 0.0
    %840 = vmatpush1.msra.mxu0 0.0
    %841 = vmatprep.subr.mxu0 0.0
    %842 = vmatpush1.msra.mxu0 0.0
    %843 = vmatprep.subr.mxu0 0.0
    %844 = vmatpush1.msra.mxu0 0.0
    %845 = vmatprep.subr.mxu0 0.0
    %846 = vmatpush1.msra.mxu0 0.0
    %847 = vmatprep.subr.mxu0 0.0
    %848 = vmatpush1.msra.mxu0 0.0
    %849 = vmatprep.subr.mxu0 0.0
    %850 = vmatpush1.msra.mxu0 0.0
    %851 = vmatprep.subr.mxu0 0.0
    %852 = vmatpush1.msra.mxu0 0.0
    %853 = vmatprep.subr.mxu0 0.0
    %854 = vmatpush1.msra.mxu0 0.0
    %855 = vmatprep.subr.mxu0 0.0
    %856 = vmatpush1.msra.mxu0 0.0
    %857 = vmatprep.subr.mxu0 0.0
    %858 = vmatpush1.msra.mxu0 0.0
    %859 = vmatprep.subr.mxu0 0.0
    %860 = vmatpush1.msra.mxu0 0.0
    %861 = vmatprep.subr.mxu0 0.0
    %862 = vmatpush1.msra.mxu0 0.0
    %863 = vmatprep.subr.mxu0 0.0
    %864 = vmatpush1.msra.mxu0 0.0
    %865 = vmatprep.mubr.f32.mxu0 0.0
    %866 = vmatmul.mubr.f32.gmra.mrb[0].mxu0 %v799
    %v867 = vpop.f32.mrb[0].mxu0
    %v868 = vadd.f32 0.0, %v867
    %v869 = vpop.f32.mrb[0].mxu0
    %870 = vdwg.mxu0
    %v871 = vadd.f32 %v797, %v868
    %v872 = vxor.u32 %v871, 2147483648
    %v873 = vmul.f32 %v872, 1.442695
    %v874 = vpow.pop %v873
    %v875 = vadd.f32 %v874, 1.0
    %v876 = vrcp.pop %v875
    %v877 = vmul.f32 1.0, %v876
    %v878 = vtanh.pop %v871
    %879 = vrot.lane.b32.xlu0 %v877, 96
    %v880 = vpop.permute.xlu0 %879
    %881 = vrot.lane.b32.xlu0 %v878, 64
    %v882 = vpop.permute.xlu0 %881
    %883 = vrot.lane.b32.xlu0 %v877, 32
    %v884 = vpop.permute.xlu0 %883
    %v885 = vmul.f32 %v880, %v793
    %v886 = vmul.f32 %v877, %v882
    %v887 = vadd.f32 %v885, %v886
    %v888 = vtanh.pop %v887
    %v889 = vmul.f32 %v884, %v888
    %890 = vst.msk [vmem:[#allocation3 + $0xc] sm:$0x3] %vm325, %v889
    %v891 = vld [vmem:[#allocation2 + $0xe] sm:$0x3]
    %v893 = vsel %vm230, %v889, 0
    %895 = vmatprep.subr.mxu0 0.0
    %896 = vmatpush1.msra.mxu0 %v224
    %897 = vmatprep.subr.mxu0 0.0
    %898 = vmatpush1.msra.mxu0 %v225
    %899 = vmatprep.subr.mxu0 0.0
    %900 = vmatpush1.msra.mxu0 %v226
    %901 = vmatprep.subr.mxu0 0.0
    %902 = vmatpush1.msra.mxu0 %v227
    %903 = vmatprep.subr.mxu0 0.0
    %904 = vmatpush1.msra.mxu0 0.0
    %905 = vmatprep.subr.mxu0 0.0
    %906 = vmatpush1.msra.mxu0 0.0
    %907 = vmatprep.subr.mxu0 0.0
    %908 = vmatpush1.msra.mxu0 0.0
    %909 = vmatprep.subr.mxu0 0.0
    %910 = vmatpush1.msra.mxu0 0.0
    %911 = vmatprep.subr.mxu0 0.0
    %912 = vmatpush1.msra.mxu0 0.0
    %913 = vmatprep.subr.mxu0 0.0
    %914 = vmatpush1.msra.mxu0 0.0
    %915 = vmatprep.subr.mxu0 0.0
    %916 = vmatpush1.msra.mxu0 0.0
    %917 = vmatprep.subr.mxu0 0.0
    %918 = vmatpush1.msra.mxu0 0.0
    %919 = vmatprep.subr.mxu0 0.0
    %920 = vmatpush1.msra.mxu0 0.0
    %921 = vmatprep.subr.mxu0 0.0
    %922 = vmatpush1.msra.mxu0 0.0
    %923 = vmatprep.subr.mxu0 0.0
    %924 = vmatpush1.msra.mxu0 0.0
    %925 = vmatprep.subr.mxu0 0.0
    %926 = vmatpush1.msra.mxu0 0.0
    %927 = vmatprep.subr.mxu0 0.0
    %928 = vmatpush1.msra.mxu0 0.0
    %929 = vmatprep.subr.mxu0 0.0
    %930 = vmatpush1.msra.mxu0 0.0
    %931 = vmatprep.subr.mxu0 0.0
    %932 = vmatpush1.msra.mxu0 0.0
    %933 = vmatprep.subr.mxu0 0.0
    %934 = vmatpush1.msra.mxu0 0.0
    %935 = vmatprep.subr.mxu0 0.0
    %936 = vmatpush1.msra.mxu0 0.0
    %937 = vmatprep.subr.mxu0 0.0
    %938 = vmatpush1.msra.mxu0 0.0
    %939 = vmatprep.subr.mxu0 0.0
    %940 = vmatpush1.msra.mxu0 0.0
    %941 = vmatprep.subr.mxu0 0.0
    %942 = vmatpush1.msra.mxu0 0.0
    %943 = vmatprep.subr.mxu0 0.0
    %944 = vmatpush1.msra.mxu0 0.0
    %945 = vmatprep.subr.mxu0 0.0
    %946 = vmatpush1.msra.mxu0 0.0
    %947 = vmatprep.subr.mxu0 0.0
    %948 = vmatpush1.msra.mxu0 0.0
    %949 = vmatprep.subr.mxu0 0.0
    %950 = vmatpush1.msra.mxu0 0.0
    %951 = vmatprep.subr.mxu0 0.0
    %952 = vmatpush1.msra.mxu0 0.0
    %953 = vmatprep.subr.mxu0 0.0
    %954 = vmatpush1.msra.mxu0 0.0
    %955 = vmatprep.subr.mxu0 0.0
    %956 = vmatpush1.msra.mxu0 0.0
    %957 = vmatprep.subr.mxu0 0.0
    %958 = vmatpush1.msra.mxu0 0.0
    %959 = vmatprep.mubr.f32.mxu0 0.0
    %960 = vmatmul.mubr.f32.gmra.mrb[0].mxu0 %v893
    %v961 = vpop.f32.mrb[0].mxu0
    %v962 = vadd.f32 0.0, %v961
    %v963 = vpop.f32.mrb[0].mxu0
    %964 = vdwg.mxu0
    %v965 = vadd.f32 %v891, %v962
    %v966 = vxor.u32 %v965, 2147483648
    %v967 = vmul.f32 %v966, 1.442695
    %v968 = vpow.pop %v967
    %v969 = vadd.f32 %v968, 1.0
    %v970 = vrcp.pop %v969
    %v971 = vmul.f32 1.0, %v970
    %v972 = vtanh.pop %v965
    %973 = vrot.lane.b32.xlu0 %v971, 96
    %v974 = vpop.permute.xlu0 %973
    %975 = vrot.lane.b32.xlu0 %v972, 64
    %v976 = vpop.permute.xlu0 %975
    %977 = vrot.lane.b32.xlu0 %v971, 32
    %v978 = vpop.permute.xlu0 %977
    %v979 = vmul.f32 %v974, %v887
    %v980 = vmul.f32 %v971, %v976
    %v981 = vadd.f32 %v979, %v980
    %v982 = vtanh.pop %v981
    %v983 = vmul.f32 %v978, %v982
    %984 = vst.msk [vmem:[#allocation3 + $0xe] sm:$0x3] %vm325, %v983
    %985 = vst.msk [vmem:[#allocation10] sm:$0x3] %vm325, %v983
    %986 = vst.msk [vmem:[#allocation11] sm:$0x3] %vm325, %v981
    %v987 = vld [vmem:[#allocation3] sm:$0xff]
    %v988 = vld [vmem:[#allocation3 + $0x8] sm:$0xff]
    %v989 = vld [vmem:[%s6] sm:$0xff]
    %v990 = vld [vmem:[%s6 + $0x8] sm:$0xff]
    %v991 = vld [vmem:[%s6 + $0x10] sm:$0xff]
    %v992 = vld [vmem:[%s6 + $0x18] sm:$0xff]
    %v993 = vld [vmem:[%s8] sm:$0x1]
    %v995 = vlaneseq
    %v996 = vshrl.u32 %v995, 7
    %v997 = vsub.s32 0, %v996
    %v998 = vrot.slane %v993, %v997
    %v1001 = vsel %vm230, %v987, 0
    %v1004 = vsel %vm230, %v988, 0
    %1006 = vmatprep.subr.mxu0 0.0
    %1007 = vmatpush1.msra.mxu0 %v989
    %1008 = vmatprep.subr.mxu0 0.0
    %1009 = vmatpush1.msra.mxu0 %v990
    %1010 = vmatprep.subr.mxu0 0.0
    %1011 = vmatpush1.msra.mxu0 %v991
    %1012 = vmatprep.subr.mxu0 0.0
    %1013 = vmatpush1.msra.mxu0 %v992
    %1014 = vmatprep.subr.mxu0 0.0
    %1015 = vmatpush1.msra.mxu0 0.0
    %1016 = vmatprep.subr.mxu0 0.0
    %1017 = vmatpush1.msra.mxu0 0.0
    %1018 = vmatprep.subr.mxu0 0.0
    %1019 = vmatpush1.msra.mxu0 0.0
    %1020 = vmatprep.subr.mxu0 0.0
    %1021 = vmatpush1.msra.mxu0 0.0
    %1022 = vmatprep.subr.mxu0 0.0
    %1023 = vmatpush1.msra.mxu0 0.0
    %1024 = vmatprep.subr.mxu0 0.0
    %1025 = vmatpush1.msra.mxu0 0.0
    %1026 = vmatprep.subr.mxu0 0.0
    %1027 = vmatpush1.msra.mxu0 0.0
    %1028 = vmatprep.subr.mxu0 0.0
    %1029 = vmatpush1.msra.mxu0 0.0
    %1030 = vmatprep.subr.mxu0 0.0
    %1031 = vmatpush1.msra.mxu0 0.0
    %1032 = vmatprep.subr.mxu0 0.0
    %1033 = vmatpush1.msra.mxu0 0.0
    %1034 = vmatprep.subr.mxu0 0.0
    %1035 = vmatpush1.msra.mxu0 0.0
    %1036 = vmatprep.subr.mxu0 0.0
    %1037 = vmatpush1.msra.mxu0 0.0
    %1038 = vmatprep.subr.mxu0 0.0
    %1039 = vmatpush1.msra.mxu0 0.0
    %1040 = vmatprep.subr.mxu0 0.0
    %1041 = vmatpush1.msra.mxu0 0.0
    %1042 = vmatprep.subr.mxu0 0.0
    %1043 = vmatpush1.msra.mxu0 0.0
    %1044 = vmatprep.subr.mxu0 0.0
    %1045 = vmatpush1.msra.mxu0 0.0
    %1046 = vmatprep.subr.mxu0 0.0
    %1047 = vmatpush1.msra.mxu0 0.0
    %1048 = vmatprep.subr.mxu0 0.0
    %1049 = vmatpush1.msra.mxu0 0.0
    %1050 = vmatprep.subr.mxu0 0.0
    %1051 = vmatpush1.msra.mxu0 0.0
    %1052 = vmatprep.subr.mxu0 0.0
    %1053 = vmatpush1.msra.mxu0 0.0
    %1054 = vmatprep.subr.mxu0 0.0
    %1055 = vmatpush1.msra.mxu0 0.0
    %1056 = vmatprep.subr.mxu0 0.0
    %1057 = vmatpush1.msra.mxu0 0.0
    %1058 = vmatprep.subr.mxu0 0.0
    %1059 = vmatpush1.msra.mxu0 0.0
    %1060 = vmatprep.subr.mxu0 0.0
    %1061 = vmatpush1.msra.mxu0 0.0
    %1062 = vmatprep.subr.mxu0 0.0
    %1063 = vmatpush1.msra.mxu0 0.0
    %1064 = vmatprep.subr.mxu0 0.0
    %1065 = vmatpush1.msra.mxu0 0.0
    %1066 = vmatprep.subr.mxu0 0.0
    %1067 = vmatpush1.msra.mxu0 0.0
    %1068 = vmatprep.subr.mxu0 0.0
    %1069 = vmatpush1.msra.mxu0 0.0
    %1070 = vmatprep.mubr.f32.mxu0 0.0
    %1071 = vmatmul.mubr.f32.gmra.mrb[0].mxu0 %v1001
    %v1072 = vpop.f32.mrb[0].mxu0
    %v1073 = vadd.f32 %v998, %v1072
    %v1074 = vpop.f32.mrb[0].mxu0
    %1075 = vmatprep.mubr.f32.mxu0 0.0
    %1076 = vmatmul.mubr.f32.gmra.mrb[0].mxu0 %v1004
    %v1077 = vpop.f32.mrb[0].mxu0
    %v1078 = vadd.f32 %v998, %v1077
    %v1079 = vpop.f32.mrb[0].mxu0
    %1080 = vdwg.mxu0
    %1081 = vst [vmem:[#allocation2] sm:$0xff] %v1073
    %1082 = vst [vmem:[#allocation2 + $0x8] sm:$0xff] %v1078
    %v1083 = vld [vmem:[#allocation9] sm:$0xff]
    %v1084 = vld [vmem:[#allocation9 + $0x8] sm:$0xff]
    %v1085 = vld [vmem:[#allocation9 + $0x10] sm:$0xff]
    %v1086 = vld [vmem:[#allocation9 + $0x18] sm:$0xff]
    %s1087 = scalar_lea.vmem %s1, 2
    %v1088 = vld [vmem:[%s1087] sm:$0x3]
    %s1089 = scalar_lea.vmem %s2, 2
    %v1090 = vld [vmem:[%s1089] sm:$0x3]
    %v1091 = vsel %vm230, %v1090, 0.0
    %v1092 = vld [vmem:[#allocation2] sm:$0x3]
    %v1094 = vsel %vm230, %v1088, 0
    %1096 = vmatprep.subr.mxu0 0.0
    %1097 = vmatpush1.msra.mxu0 %v1083
    %1098 = vmatprep.subr.mxu0 0.0
    %1099 = vmatpush1.msra.mxu0 %v1084
    %1100 = vmatprep.subr.mxu0 0.0
    %1101 = vmatpush1.msra.mxu0 %v1085
    %1102 = vmatprep.subr.mxu0 0.0
    %1103 = vmatpush1.msra.mxu0 %v1086
    %1104 = vmatprep.subr.mxu0 0.0
    %1105 = vmatpush1.msra.mxu0 0.0
    %1106 = vmatprep.subr.mxu0 0.0
    %1107 = vmatpush1.msra.mxu0 0.0
    %1108 = vmatprep.subr.mxu0 0.0
    %1109 = vmatpush1.msra.mxu0 0.0
    %1110 = vmatprep.subr.mxu0 0.0
    %1111 = vmatpush1.msra.mxu0 0.0
    %1112 = vmatprep.subr.mxu0 0.0
    %1113 = vmatpush1.msra.mxu0 0.0
    %1114 = vmatprep.subr.mxu0 0.0
    %1115 = vmatpush1.msra.mxu0 0.0
    %1116 = vmatprep.subr.mxu0 0.0
    %1117 = vmatpush1.msra.mxu0 0.0
    %1118 = vmatprep.subr.mxu0 0.0
    %1119 = vmatpush1.msra.mxu0 0.0
    %1120 = vmatprep.subr.mxu0 0.0
    %1121 = vmatpush1.msra.mxu0 0.0
    %1122 = vmatprep.subr.mxu0 0.0
    %1123 = vmatpush1.msra.mxu0 0.0
    %1124 = vmatprep.subr.mxu0 0.0
    %1125 = vmatpush1.msra.mxu0 0.0
    %1126 = vmatprep.subr.mxu0 0.0
    %1127 = vmatpush1.msra.mxu0 0.0
    %1128 = vmatprep.subr.mxu0 0.0
    %1129 = vmatpush1.msra.mxu0 0.0
    %1130 = vmatprep.subr.mxu0 0.0
    %1131 = vmatpush1.msra.mxu0 0.0
    %1132 = vmatprep.subr.mxu0 0.0
    %1133 = vmatpush1.msra.mxu0 0.0
    %1134 = vmatprep.subr.mxu0 0.0
    %1135 = vmatpush1.msra.mxu0 0.0
    %1136 = vmatprep.subr.mxu0 0.0
    %1137 = vmatpush1.msra.mxu0 0.0
    %1138 = vmatprep.subr.mxu0 0.0
    %1139 = vmatpush1.msra.mxu0 0.0
    %1140 = vmatprep.subr.mxu0 0.0
    %1141 = vmatpush1.msra.mxu0 0.0
    %1142 = vmatprep.subr.mxu0 0.0
    %1143 = vmatpush1.msra.mxu0 0.0
    %1144 = vmatprep.subr.mxu0 0.0
    %1145 = vmatpush1.msra.mxu0 0.0
    %1146 = vmatprep.subr.mxu0 0.0
    %1147 = vmatpush1.msra.mxu0 0.0
    %1148 = vmatprep.subr.mxu0 0.0
    %1149 = vmatpush1.msra.mxu0 0.0
    %1150 = vmatprep.subr.mxu0 0.0
    %1151 = vmatpush1.msra.mxu0 0.0
    %1152 = vmatprep.subr.mxu0 0.0
    %1153 = vmatpush1.msra.mxu0 0.0
    %1154 = vmatprep.subr.mxu0 0.0
    %1155 = vmatpush1.msra.mxu0 0.0
    %1156 = vmatprep.subr.mxu0 0.0
    %1157 = vmatpush1.msra.mxu0 0.0
    %1158 = vmatprep.subr.mxu0 0.0
    %1159 = vmatpush1.msra.mxu0 0.0
    %1160 = vmatprep.mubr.f32.mxu0 0.0
    %1161 = vmatmul.mubr.f32.gmra.mrb[0].mxu0 %v1094
    %v1162 = vpop.f32.mrb[0].mxu0
    %v1163 = vadd.f32 0.0, %v1162
    %v1164 = vpop.f32.mrb[0].mxu0
    %1165 = vdwg.mxu0
    %v1166 = vadd.f32 %v1092, %v1163
    %v1167 = vxor.u32 %v1166, 2147483648
    %v1168 = vmul.f32 %v1167, 1.442695
    %v1169 = vpow.pop %v1168
    %v1170 = vadd.f32 %v1169, 1.0
    %v1171 = vrcp.pop %v1170
    %v1172 = vmul.f32 1.0, %v1171
    %v1173 = vtanh.pop %v1166
    %1174 = vrot.lane.b32.xlu0 %v1172, 96
    %v1175 = vpop.permute.xlu0 %1174
    %1176 = vrot.lane.b32.xlu0 %v1173, 64
    %v1177 = vpop.permute.xlu0 %1176
    %1178 = vrot.lane.b32.xlu0 %v1172, 32
    %v1179 = vpop.permute.xlu0 %1178
    %v1180 = vmul.f32 %v1175, %v1091
    %v1181 = vmul.f32 %v1172, %v1177
    %v1182 = vadd.f32 %v1180, %v1181
    %v1183 = vtanh.pop %v1182
    %v1184 = vmul.f32 %v1179, %v1183
    %1185 = vst.msk [vmem:[#allocation3] sm:$0x3] %vm325, %v1184
    %v1186 = vld [vmem:[#allocation2 + $0x2] sm:$0x3]
    %v1188 = vsel %vm230, %v1184, 0
    %1190 = vmatprep.subr.mxu0 0.0
    %1191 = vmatpush1.msra.mxu0 %v1083
    %1192 = vmatprep.subr.mxu0 0.0
    %1193 = vmatpush1.msra.mxu0 %v1084
    %1194 = vmatprep.subr.mxu0 0.0
    %1195 = vmatpush1.msra.mxu0 %v1085
    %1196 = vmatprep.subr.mxu0 0.0
    %1197 = vmatpush1.msra.mxu0 %v1086
    %1198 = vmatprep.subr.mxu0 0.0
    %1199 = vmatpush1.msra.mxu0 0.0
    %1200 = vmatprep.subr.mxu0 0.0
    %1201 = vmatpush1.msra.mxu0 0.0
    %1202 = vmatprep.subr.mxu0 0.0
    %1203 = vmatpush1.msra.mxu0 0.0
    %1204 = vmatprep.subr.mxu0 0.0
    %1205 = vmatpush1.msra.mxu0 0.0
    %1206 = vmatprep.subr.mxu0 0.0
    %1207 = vmatpush1.msra.mxu0 0.0
    %1208 = vmatprep.subr.mxu0 0.0
    %1209 = vmatpush1.msra.mxu0 0.0
    %1210 = vmatprep.subr.mxu0 0.0
    %1211 = vmatpush1.msra.mxu0 0.0
    %1212 = vmatprep.subr.mxu0 0.0
    %1213 = vmatpush1.msra.mxu0 0.0
    %1214 = vmatprep.subr.mxu0 0.0
    %1215 = vmatpush1.msra.mxu0 0.0
    %1216 = vmatprep.subr.mxu0 0.0
    %1217 = vmatpush1.msra.mxu0 0.0
    %1218 = vmatprep.subr.mxu0 0.0
    %1219 = vmatpush1.msra.mxu0 0.0
    %1220 = vmatprep.subr.mxu0 0.0
    %1221 = vmatpush1.msra.mxu0 0.0
    %1222 = vmatprep.subr.mxu0 0.0
    %1223 = vmatpush1.msra.mxu0 0.0
    %1224 = vmatprep.subr.mxu0 0.0
    %1225 = vmatpush1.msra.mxu0 0.0
    %1226 = vmatprep.subr.mxu0 0.0
    %1227 = vmatpush1.msra.mxu0 0.0
    %1228 = vmatprep.subr.mxu0 0.0
    %1229 = vmatpush1.msra.mxu0 0.0
    %1230 = vmatprep.subr.mxu0 0.0
    %1231 = vmatpush1.msra.mxu0 0.0
    %1232 = vmatprep.subr.mxu0 0.0
    %1233 = vmatpush1.msra.mxu0 0.0
    %1234 = vmatprep.subr.mxu0 0.0
    %1235 = vmatpush1.msra.mxu0 0.0
    %1236 = vmatprep.subr.mxu0 0.0
    %1237 = vmatpush1.msra.mxu0 0.0
    %1238 = vmatprep.subr.mxu0 0.0
    %1239 = vmatpush1.msra.mxu0 0.0
    %1240 = vmatprep.subr.mxu0 0.0
    %1241 = vmatpush1.msra.mxu0 0.0
    %1242 = vmatprep.subr.mxu0 0.0
    %1243 = vmatpush1.msra.mxu0 0.0
    %1244 = vmatprep.subr.mxu0 0.0
    %1245 = vmatpush1.msra.mxu0 0.0
    %1246 = vmatprep.subr.mxu0 0.0
    %1247 = vmatpush1.msra.mxu0 0.0
    %1248 = vmatprep.subr.mxu0 0.0
    %1249 = vmatpush1.msra.mxu0 0.0
    %1250 = vmatprep.subr.mxu0 0.0
    %1251 = vmatpush1.msra.mxu0 0.0
    %1252 = vmatprep.subr.mxu0 0.0
    %1253 = vmatpush1.msra.mxu0 0.0
    %1254 = vmatprep.mubr.f32.mxu0 0.0
    %1255 = vmatmul.mubr.f32.gmra.mrb[0].mxu0 %v1188
    %v1256 = vpop.f32.mrb[0].mxu0
    %v1257 = vadd.f32 0.0, %v1256
    %v1258 = vpop.f32.mrb[0].mxu0
    %1259 = vdwg.mxu0
    %v1260 = vadd.f32 %v1186, %v1257
    %v1261 = vxor.u32 %v1260, 2147483648
    %v1262 = vmul.f32 %v1261, 1.442695
    %v1263 = vpow.pop %v1262
    %v1264 = vadd.f32 %v1263, 1.0
    %v1265 = vrcp.pop %v1264
    %v1266 = vmul.f32 1.0, %v1265
    %v1267 = vtanh.pop %v1260
    %1268 = vrot.lane.b32.xlu0 %v1266, 96
    %v1269 = vpop.permute.xlu0 %1268
    %1270 = vrot.lane.b32.xlu0 %v1267, 64
    %v1271 = vpop.permute.xlu0 %1270
    %1272 = vrot.lane.b32.xlu0 %v1266, 32
    %v1273 = vpop.permute.xlu0 %1272
    %v1274 = vmul.f32 %v1269, %v1182
    %v1275 = vmul.f32 %v1266, %v1271
    %v1276 = vadd.f32 %v1274, %v1275
    %v1277 = vtanh.pop %v1276
    %v1278 = vmul.f32 %v1273, %v1277
    %1279 = vst.msk [vmem:[#allocation3 + $0x2] sm:$0x3] %vm325, %v1278
    %v1280 = vld [vmem:[#allocation2 + $0x4] sm:$0x3]
    %v1282 = vsel %vm230, %v1278, 0
    %1284 = vmatprep.subr.mxu0 0.0
    %1285 = vmatpush1.msra.mxu0 %v1083
    %1286 = vmatprep.subr.mxu0 0.0
    %1287 = vmatpush1.msra.mxu0 %v1084
    %1288 = vmatprep.subr.mxu0 0.0
    %1289 = vmatpush1.msra.mxu0 %v1085
    %1290 = vmatprep.subr.mxu0 0.0
    %1291 = vmatpush1.msra.mxu0 %v1086
    %1292 = vmatprep.subr.mxu0 0.0
    %1293 = vmatpush1.msra.mxu0 0.0
    %1294 = vmatprep.subr.mxu0 0.0
    %1295 = vmatpush1.msra.mxu0 0.0
    %1296 = vmatprep.subr.mxu0 0.0
    %1297 = vmatpush1.msra.mxu0 0.0
    %1298 = vmatprep.subr.mxu0 0.0
    %1299 = vmatpush1.msra.mxu0 0.0
    %1300 = vmatprep.subr.mxu0 0.0
    %1301 = vmatpush1.msra.mxu0 0.0
    %1302 = vmatprep.subr.mxu0 0.0
    %1303 = vmatpush1.msra.mxu0 0.0
    %1304 = vmatprep.subr.mxu0 0.0
    %1305 = vmatpush1.msra.mxu0 0.0
    %1306 = vmatprep.subr.mxu0 0.0
    %1307 = vmatpush1.msra.mxu0 0.0
    %1308 = vmatprep.subr.mxu0 0.0
    %1309 = vmatpush1.msra.mxu0 0.0
    %1310 = vmatprep.subr.mxu0 0.0
    %1311 = vmatpush1.msra.mxu0 0.0
    %1312 = vmatprep.subr.mxu0 0.0
    %1313 = vmatpush1.msra.mxu0 0.0
    %1314 = vmatprep.subr.mxu0 0.0
    %1315 = vmatpush1.msra.mxu0 0.0
    %1316 = vmatprep.subr.mxu0 0.0
    %1317 = vmatpush1.msra.mxu0 0.0
    %1318 = vmatprep.subr.mxu0 0.0
    %1319 = vmatpush1.msra.mxu0 0.0
    %1320 = vmatprep.subr.mxu0 0.0
    %1321 = vmatpush1.msra.mxu0 0.0
    %1322 = vmatprep.subr.mxu0 0.0
    %1323 = vmatpush1.msra.mxu0 0.0
    %1324 = vmatprep.subr.mxu0 0.0
    %1325 = vmatpush1.msra.mxu0 0.0
    %1326 = vmatprep.subr.mxu0 0.0
    %1327 = vmatpush1.msra.mxu0 0.0
    %1328 = vmatprep.subr.mxu0 0.0
    %1329 = vmatpush1.msra.mxu0 0.0
    %1330 = vmatprep.subr.mxu0 0.0
    %1331 = vmatpush1.msra.mxu0 0.0
    %1332 = vmatprep.subr.mxu0 0.0
    %1333 = vmatpush1.msra.mxu0 0.0
    %1334 = vmatprep.subr.mxu0 0.0
    %1335 = vmatpush1.msra.mxu0 0.0
    %1336 = vmatprep.subr.mxu0 0.0
    %1337 = vmatpush1.msra.mxu0 0.0
    %1338 = vmatprep.subr.mxu0 0.0
    %1339 = vmatpush1.msra.mxu0 0.0
    %1340 = vmatprep.subr.mxu0 0.0
    %1341 = vmatpush1.msra.mxu0 0.0
    %1342 = vmatprep.subr.mxu0 0.0
    %1343 = vmatpush1.msra.mxu0 0.0
    %1344 = vmatprep.subr.mxu0 0.0
    %1345 = vmatpush1.msra.mxu0 0.0
    %1346 = vmatprep.subr.mxu0 0.0
    %1347 = vmatpush1.msra.mxu0 0.0
    %1348 = vmatprep.mubr.f32.mxu0 0.0
    %1349 = vmatmul.mubr.f32.gmra.mrb[0].mxu0 %v1282
    %v1350 = vpop.f32.mrb[0].mxu0
    %v1351 = vadd.f32 0.0, %v1350
    %v1352 = vpop.f32.mrb[0].mxu0
    %1353 = vdwg.mxu0
    %v1354 = vadd.f32 %v1280, %v1351
    %v1355 = vxor.u32 %v1354, 2147483648
    %v1356 = vmul.f32 %v1355, 1.442695
    %v1357 = vpow.pop %v1356
    %v1358 = vadd.f32 %v1357, 1.0
    %v1359 = vrcp.pop %v1358
    %v1360 = vmul.f32 1.0, %v1359
    %v1361 = vtanh.pop %v1354
    %1362 = vrot.lane.b32.xlu0 %v1360, 96
    %v1363 = vpop.permute.xlu0 %1362
    %1364 = vrot.lane.b32.xlu0 %v1361, 64
    %v1365 = vpop.permute.xlu0 %1364
    %1366 = vrot.lane.b32.xlu0 %v1360, 32
    %v1367 = vpop.permute.xlu0 %1366
    %v1368 = vmul.f32 %v1363, %v1276
    %v1369 = vmul.f32 %v1360, %v1365
    %v1370 = vadd.f32 %v1368, %v1369
    %v1371 = vtanh.pop %v1370
    %v1372 = vmul.f32 %v1367, %v1371
    %1373 = vst.msk [vmem:[#allocation3 + $0x4] sm:$0x3] %vm325, %v1372
    %v1374 = vld [vmem:[#allocation2 + $0x6] sm:$0x3]
    %v1376 = vsel %vm230, %v1372, 0
    %1378 = vmatprep.subr.mxu0 0.0
    %1379 = vmatpush1.msra.mxu0 %v1083
    %1380 = vmatprep.subr.mxu0 0.0
    %1381 = vmatpush1.msra.mxu0 %v1084
    %1382 = vmatprep.subr.mxu0 0.0
    %1383 = vmatpush1.msra.mxu0 %v1085
    %1384 = vmatprep.subr.mxu0 0.0
    %1385 = vmatpush1.msra.mxu0 %v1086
    %1386 = vmatprep.subr.mxu0 0.0
    %1387 = vmatpush1.msra.mxu0 0.0
    %1388 = vmatprep.subr.mxu0 0.0
    %1389 = vmatpush1.msra.mxu0 0.0
    %1390 = vmatprep.subr.mxu0 0.0
    %1391 = vmatpush1.msra.mxu0 0.0
    %1392 = vmatprep.subr.mxu0 0.0
    %1393 = vmatpush1.msra.mxu0 0.0
    %1394 = vmatprep.subr.mxu0 0.0
    %1395 = vmatpush1.msra.mxu0 0.0
    %1396 = vmatprep.subr.mxu0 0.0
    %1397 = vmatpush1.msra.mxu0 0.0
    %1398 = vmatprep.subr.mxu0 0.0
    %1399 = vmatpush1.msra.mxu0 0.0
    %1400 = vmatprep.subr.mxu0 0.0
    %1401 = vmatpush1.msra.mxu0 0.0
    %1402 = vmatprep.subr.mxu0 0.0
    %1403 = vmatpush1.msra.mxu0 0.0
    %1404 = vmatprep.subr.mxu0 0.0
    %1405 = vmatpush1.msra.mxu0 0.0
    %1406 = vmatprep.subr.mxu0 0.0
    %1407 = vmatpush1.msra.mxu0 0.0
    %1408 = vmatprep.subr.mxu0 0.0
    %1409 = vmatpush1.msra.mxu0 0.0
    %1410 = vmatprep.subr.mxu0 0.0
    %1411 = vmatpush1.msra.mxu0 0.0
    %1412 = vmatprep.subr.mxu0 0.0
    %1413 = vmatpush1.msra.mxu0 0.0
    %1414 = vmatprep.subr.mxu0 0.0
    %1415 = vmatpush1.msra.mxu0 0.0
    %1416 = vmatprep.subr.mxu0 0.0
    %1417 = vmatpush1.msra.mxu0 0.0
    %1418 = vmatprep.subr.mxu0 0.0
    %1419 = vmatpush1.msra.mxu0 0.0
    %1420 = vmatprep.subr.mxu0 0.0
    %1421 = vmatpush1.msra.mxu0 0.0
    %1422 = vmatprep.subr.mxu0 0.0
    %1423 = vmatpush1.msra.mxu0 0.0
    %1424 = vmatprep.subr.mxu0 0.0
    %1425 = vmatpush1.msra.mxu0 0.0
    %1426 = vmatprep.subr.mxu0 0.0
    %1427 = vmatpush1.msra.mxu0 0.0
    %1428 = vmatprep.subr.mxu0 0.0
    %1429 = vmatpush1.msra.mxu0 0.0
    %1430 = vmatprep.subr.mxu0 0.0
    %1431 = vmatpush1.msra.mxu0 0.0
    %1432 = vmatprep.subr.mxu0 0.0
    %1433 = vmatpush1.msra.mxu0 0.0
    %1434 = vmatprep.subr.mxu0 0.0
    %1435 = vmatpush1.msra.mxu0 0.0
    %1436 = vmatprep.subr.mxu0 0.0
    %1437 = vmatpush1.msra.mxu0 0.0
    %1438 = vmatprep.subr.mxu0 0.0
    %1439 = vmatpush1.msra.mxu0 0.0
    %1440 = vmatprep.subr.mxu0 0.0
    %1441 = vmatpush1.msra.mxu0 0.0
    %1442 = vmatprep.mubr.f32.mxu0 0.0
    %1443 = vmatmul.mubr.f32.gmra.mrb[0].mxu0 %v1376
    %v1444 = vpop.f32.mrb[0].mxu0
    %v1445 = vadd.f32 0.0, %v1444
    %v1446 = vpop.f32.mrb[0].mxu0
    %1447 = vdwg.mxu0
    %v1448 = vadd.f32 %v1374, %v1445
    %v1449 = vxor.u32 %v1448, 2147483648
    %v1450 = vmul.f32 %v1449, 1.442695
    %v1451 = vpow.pop %v1450
    %v1452 = vadd.f32 %v1451, 1.0
    %v1453 = vrcp.pop %v1452
    %v1454 = vmul.f32 1.0, %v1453
    %v1455 = vtanh.pop %v1448
    %1456 = vrot.lane.b32.xlu0 %v1454, 96
    %v1457 = vpop.permute.xlu0 %1456
    %1458 = vrot.lane.b32.xlu0 %v1455, 64
    %v1459 = vpop.permute.xlu0 %1458
    %1460 = vrot.lane.b32.xlu0 %v1454, 32
    %v1461 = vpop.permute.xlu0 %1460
    %v1462 = vmul.f32 %v1457, %v1370
    %v1463 = vmul.f32 %v1454, %v1459
    %v1464 = vadd.f32 %v1462, %v1463
    %v1465 = vtanh.pop %v1464
    %v1466 = vmul.f32 %v1461, %v1465
    %1467 = vst.msk [vmem:[#allocation3 + $0x6] sm:$0x3] %vm325, %v1466
    %v1468 = vld [vmem:[#allocation2 + $0x8] sm:$0x3]
    %v1470 = vsel %vm230, %v1466, 0
    %1472 = vmatprep.subr.mxu0 0.0
    %1473 = vmatpush1.msra.mxu0 %v1083
    %1474 = vmatprep.subr.mxu0 0.0
    %1475 = vmatpush1.msra.mxu0 %v1084
    %1476 = vmatprep.subr.mxu0 0.0
    %1477 = vmatpush1.msra.mxu0 %v1085
    %1478 = vmatprep.subr.mxu0 0.0
    %1479 = vmatpush1.msra.mxu0 %v1086
    %1480 = vmatprep.subr.mxu0 0.0
    %1481 = vmatpush1.msra.mxu0 0.0
    %1482 = vmatprep.subr.mxu0 0.0
    %1483 = vmatpush1.msra.mxu0 0.0
    %1484 = vmatprep.subr.mxu0 0.0
    %1485 = vmatpush1.msra.mxu0 0.0
    %1486 = vmatprep.subr.mxu0 0.0
    %1487 = vmatpush1.msra.mxu0 0.0
    %1488 = vmatprep.subr.mxu0 0.0
    %1489 = vmatpush1.msra.mxu0 0.0
    %1490 = vmatprep.subr.mxu0 0.0
    %1491 = vmatpush1.msra.mxu0 0.0
    %1492 = vmatprep.subr.mxu0 0.0
    %1493 = vmatpush1.msra.mxu0 0.0
    %1494 = vmatprep.subr.mxu0 0.0
    %1495 = vmatpush1.msra.mxu0 0.0
    %1496 = vmatprep.subr.mxu0 0.0
    %1497 = vmatpush1.msra.mxu0 0.0
    %1498 = vmatprep.subr.mxu0 0.0
    %1499 = vmatpush1.msra.mxu0 0.0
    %1500 = vmatprep.subr.mxu0 0.0
    %1501 = vmatpush1.msra.mxu0 0.0
    %1502 = vmatprep.subr.mxu0 0.0
    %1503 = vmatpush1.msra.mxu0 0.0
    %1504 = vmatprep.subr.mxu0 0.0
    %1505 = vmatpush1.msra.mxu0 0.0
    %1506 = vmatprep.subr.mxu0 0.0
    %1507 = vmatpush1.msra.mxu0 0.0
    %1508 = vmatprep.subr.mxu0 0.0
    %1509 = vmatpush1.msra.mxu0 0.0
    %1510 = vmatprep.subr.mxu0 0.0
    %1511 = vmatpush1.msra.mxu0 0.0
    %1512 = vmatprep.subr.mxu0 0.0
    %1513 = vmatpush1.msra.mxu0 0.0
    %1514 = vmatprep.subr.mxu0 0.0
    %1515 = vmatpush1.msra.mxu0 0.0
    %1516 = vmatprep.subr.mxu0 0.0
    %1517 = vmatpush1.msra.mxu0 0.0
    %1518 = vmatprep.subr.mxu0 0.0
    %1519 = vmatpush1.msra.mxu0 0.0
    %1520 = vmatprep.subr.mxu0 0.0
    %1521 = vmatpush1.msra.mxu0 0.0
    %1522 = vmatprep.subr.mxu0 0.0
    %1523 = vmatpush1.msra.mxu0 0.0
    %1524 = vmatprep.subr.mxu0 0.0
    %1525 = vmatpush1.msra.mxu0 0.0
    %1526 = vmatprep.subr.mxu0 0.0
    %1527 = vmatpush1.msra.mxu0 0.0
    %1528 = vmatprep.subr.mxu0 0.0
    %1529 = vmatpush1.msra.mxu0 0.0
    %1530 = vmatprep.subr.mxu0 0.0
    %1531 = vmatpush1.msra.mxu0 0.0
    %1532 = vmatprep.subr.mxu0 0.0
    %1533 = vmatpush1.msra.mxu0 0.0
    %1534 = vmatprep.subr.mxu0 0.0
    %1535 = vmatpush1.msra.mxu0 0.0
    %1536 = vmatprep.mubr.f32.mxu0 0.0
    %1537 = vmatmul.mubr.f32.gmra.mrb[0].mxu0 %v1470
    %v1538 = vpop.f32.mrb[0].mxu0
    %v1539 = vadd.f32 0.0, %v1538
    %v1540 = vpop.f32.mrb[0].mxu0
    %1541 = vdwg.mxu0
    %v1542 = vadd.f32 %v1468, %v1539
    %v1543 = vxor.u32 %v1542, 2147483648
    %v1544 = vmul.f32 %v1543, 1.442695
    %v1545 = vpow.pop %v1544
    %v1546 = vadd.f32 %v1545, 1.0
    %v1547 = vrcp.pop %v1546
    %v1548 = vmul.f32 1.0, %v1547
    %v1549 = vtanh.pop %v1542
    %1550 = vrot.lane.b32.xlu0 %v1548, 96
    %v1551 = vpop.permute.xlu0 %1550
    %1552 = vrot.lane.b32.xlu0 %v1549, 64
    %v1553 = vpop.permute.xlu0 %1552
    %1554 = vrot.lane.b32.xlu0 %v1548, 32
    %v1555 = vpop.permute.xlu0 %1554
    %v1556 = vmul.f32 %v1551, %v1464
    %v1557 = vmul.f32 %v1548, %v1553
    %v1558 = vadd.f32 %v1556, %v1557
    %v1559 = vtanh.pop %v1558
    %v1560 = vmul.f32 %v1555, %v1559
    %1561 = vst.msk [vmem:[#allocation3 + $0x8] sm:$0x3] %vm325, %v1560
    %v1562 = vld [vmem:[#allocation2 + $0xa] sm:$0x3]
    %v1564 = vsel %vm230, %v1560, 0
    %1566 = vmatprep.subr.mxu0 0.0
    %1567 = vmatpush1.msra.mxu0 %v1083
    %1568 = vmatprep.subr.mxu0 0.0
    %1569 = vmatpush1.msra.mxu0 %v1084
    %1570 = vmatprep.subr.mxu0 0.0
    %1571 = vmatpush1.msra.mxu0 %v1085
    %1572 = vmatprep.subr.mxu0 0.0
    %1573 = vmatpush1.msra.mxu0 %v1086
    %1574 = vmatprep.subr.mxu0 0.0
    %1575 = vmatpush1.msra.mxu0 0.0
    %1576 = vmatprep.subr.mxu0 0.0
    %1577 = vmatpush1.msra.mxu0 0.0
    %1578 = vmatprep.subr.mxu0 0.0
    %1579 = vmatpush1.msra.mxu0 0.0
    %1580 = vmatprep.subr.mxu0 0.0
    %1581 = vmatpush1.msra.mxu0 0.0
    %1582 = vmatprep.subr.mxu0 0.0
    %1583 = vmatpush1.msra.mxu0 0.0
    %1584 = vmatprep.subr.mxu0 0.0
    %1585 = vmatpush1.msra.mxu0 0.0
    %1586 = vmatprep.subr.mxu0 0.0
    %1587 = vmatpush1.msra.mxu0 0.0
    %1588 = vmatprep.subr.mxu0 0.0
    %1589 = vmatpush1.msra.mxu0 0.0
    %1590 = vmatprep.subr.mxu0 0.0
    %1591 = vmatpush1.msra.mxu0 0.0
    %1592 = vmatprep.subr.mxu0 0.0
    %1593 = vmatpush1.msra.mxu0 0.0
    %1594 = vmatprep.subr.mxu0 0.0
    %1595 = vmatpush1.msra.mxu0 0.0
    %1596 = vmatprep.subr.mxu0 0.0
    %1597 = vmatpush1.msra.mxu0 0.0
    %1598 = vmatprep.subr.mxu0 0.0
    %1599 = vmatpush1.msra.mxu0 0.0
    %1600 = vmatprep.subr.mxu0 0.0
    %1601 = vmatpush1.msra.mxu0 0.0
    %1602 = vmatprep.subr.mxu0 0.0
    %1603 = vmatpush1.msra.mxu0 0.0
    %1604 = vmatprep.subr.mxu0 0.0
    %1605 = vmatpush1.msra.mxu0 0.0
    %1606 = vmatprep.subr.mxu0 0.0
    %1607 = vmatpush1.msra.mxu0 0.0
    %1608 = vmatprep.subr.mxu0 0.0
    %1609 = vmatpush1.msra.mxu0 0.0
    %1610 = vmatprep.subr.mxu0 0.0
    %1611 = vmatpush1.msra.mxu0 0.0
    %1612 = vmatprep.subr.mxu0 0.0
    %1613 = vmatpush1.msra.mxu0 0.0
    %1614 = vmatprep.subr.mxu0 0.0
    %1615 = vmatpush1.msra.mxu0 0.0
    %1616 = vmatprep.subr.mxu0 0.0
    %1617 = vmatpush1.msra.mxu0 0.0
    %1618 = vmatprep.subr.mxu0 0.0
    %1619 = vmatpush1.msra.mxu0 0.0
    %1620 = vmatprep.subr.mxu0 0.0
    %1621 = vmatpush1.msra.mxu0 0.0
    %1622 = vmatprep.subr.mxu0 0.0
    %1623 = vmatpush1.msra.mxu0 0.0
    %1624 = vmatprep.subr.mxu0 0.0
    %1625 = vmatpush1.msra.mxu0 0.0
    %1626 = vmatprep.subr.mxu0 0.0
    %1627 = vmatpush1.msra.mxu0 0.0
    %1628 = vmatprep.subr.mxu0 0.0
    %1629 = vmatpush1.msra.mxu0 0.0
    %1630 = vmatprep.mubr.f32.mxu0 0.0
    %1631 = vmatmul.mubr.f32.gmra.mrb[0].mxu0 %v1564
    %v1632 = vpop.f32.mrb[0].mxu0
    %v1633 = vadd.f32 0.0, %v1632
    %v1634 = vpop.f32.mrb[0].mxu0
    %1635 = vdwg.mxu0
    %v1636 = vadd.f32 %v1562, %v1633
    %v1637 = vxor.u32 %v1636, 2147483648
    %v1638 = vmul.f32 %v1637, 1.442695
    %v1639 = vpow.pop %v1638
    %v1640 = vadd.f32 %v1639, 1.0
    %v1641 = vrcp.pop %v1640
    %v1642 = vmul.f32 1.0, %v1641
    %v1643 = vtanh.pop %v1636
    %1644 = vrot.lane.b32.xlu0 %v1642, 96
    %v1645 = vpop.permute.xlu0 %1644
    %1646 = vrot.lane.b32.xlu0 %v1643, 64
    %v1647 = vpop.permute.xlu0 %1646
    %1648 = vrot.lane.b32.xlu0 %v1642, 32
    %v1649 = vpop.permute.xlu0 %1648
    %v1650 = vmul.f32 %v1645, %v1558
    %v1651 = vmul.f32 %v1642, %v1647
    %v1652 = vadd.f32 %v1650, %v1651
    %v1653 = vtanh.pop %v1652
    %v1654 = vmul.f32 %v1649, %v1653
    %1655 = vst.msk [vmem:[#allocation3 + $0xa] sm:$0x3] %vm325, %v1654
    %v1656 = vld [vmem:[#allocation2 + $0xc] sm:$0x3]
    %v1658 = vsel %vm230, %v1654, 0
    %1660 = vmatprep.subr.mxu0 0.0
    %1661 = vmatpush1.msra.mxu0 %v1083
    %1662 = vmatprep.subr.mxu0 0.0
    %1663 = vmatpush1.msra.mxu0 %v1084
    %1664 = vmatprep.subr.mxu0 0.0
    %1665 = vmatpush1.msra.mxu0 %v1085
    %1666 = vmatprep.subr.mxu0 0.0
    %1667 = vmatpush1.msra.mxu0 %v1086
    %1668 = vmatprep.subr.mxu0 0.0
    %1669 = vmatpush1.msra.mxu0 0.0
    %1670 = vmatprep.subr.mxu0 0.0
    %1671 = vmatpush1.msra.mxu0 0.0
    %1672 = vmatprep.subr.mxu0 0.0
    %1673 = vmatpush1.msra.mxu0 0.0
    %1674 = vmatprep.subr.mxu0 0.0
    %1675 = vmatpush1.msra.mxu0 0.0
    %1676 = vmatprep.subr.mxu0 0.0
    %1677 = vmatpush1.msra.mxu0 0.0
    %1678 = vmatprep.subr.mxu0 0.0
    %1679 = vmatpush1.msra.mxu0 0.0
    %1680 = vmatprep.subr.mxu0 0.0
    %1681 = vmatpush1.msra.mxu0 0.0
    %1682 = vmatprep.subr.mxu0 0.0
    %1683 = vmatpush1.msra.mxu0 0.0
    %1684 = vmatprep.subr.mxu0 0.0
    %1685 = vmatpush1.msra.mxu0 0.0
    %1686 = vmatprep.subr.mxu0 0.0
    %1687 = vmatpush1.msra.mxu0 0.0
    %1688 = vmatprep.subr.mxu0 0.0
    %1689 = vmatpush1.msra.mxu0 0.0
    %1690 = vmatprep.subr.mxu0 0.0
    %1691 = vmatpush1.msra.mxu0 0.0
    %1692 = vmatprep.subr.mxu0 0.0
    %1693 = vmatpush1.msra.mxu0 0.0
    %1694 = vmatprep.subr.mxu0 0.0
    %1695 = vmatpush1.msra.mxu0 0.0
    %1696 = vmatprep.subr.mxu0 0.0
    %1697 = vmatpush1.msra.mxu0 0.0
    %1698 = vmatprep.subr.mxu0 0.0
    %1699 = vmatpush1.msra.mxu0 0.0
    %1700 = vmatprep.subr.mxu0 0.0
    %1701 = vmatpush1.msra.mxu0 0.0
    %1702 = vmatprep.subr.mxu0 0.0
    %1703 = vmatpush1.msra.mxu0 0.0
    %1704 = vmatprep.subr.mxu0 0.0
    %1705 = vmatpush1.msra.mxu0 0.0
    %1706 = vmatprep.subr.mxu0 0.0
    %1707 = vmatpush1.msra.mxu0 0.0
    %1708 = vmatprep.subr.mxu0 0.0
    %1709 = vmatpush1.msra.mxu0 0.0
    %1710 = vmatprep.subr.mxu0 0.0
    %1711 = vmatpush1.msra.mxu0 0.0
    %1712 = vmatprep.subr.mxu0 0.0
    %1713 = vmatpush1.msra.mxu0 0.0
    %1714 = vmatprep.subr.mxu0 0.0
    %1715 = vmatpush1.msra.mxu0 0.0
    %1716 = vmatprep.subr.mxu0 0.0
    %1717 = vmatpush1.msra.mxu0 0.0
    %1718 = vmatprep.subr.mxu0 0.0
    %1719 = vmatpush1.msra.mxu0 0.0
    %1720 = vmatprep.subr.mxu0 0.0
    %1721 = vmatpush1.msra.mxu0 0.0
    %1722 = vmatprep.subr.mxu0 0.0
    %1723 = vmatpush1.msra.mxu0 0.0
    %1724 = vmatprep.mubr.f32.mxu0 0.0
    %1725 = vmatmul.mubr.f32.gmra.mrb[0].mxu0 %v1658
    %v1726 = vpop.f32.mrb[0].mxu0
    %v1727 = vadd.f32 0.0, %v1726
    %v1728 = vpop.f32.mrb[0].mxu0
    %1729 = vdwg.mxu0
    %v1730 = vadd.f32 %v1656, %v1727
    %v1731 = vxor.u32 %v1730, 2147483648
    %v1732 = vmul.f32 %v1731, 1.442695
    %v1733 = vpow.pop %v1732
    %v1734 = vadd.f32 %v1733, 1.0
    %v1735 = vrcp.pop %v1734
    %v1736 = vmul.f32 1.0, %v1735
    %v1737 = vtanh.pop %v1730
    %1738 = vrot.lane.b32.xlu0 %v1736, 96
    %v1739 = vpop.permute.xlu0 %1738
    %1740 = vrot.lane.b32.xlu0 %v1737, 64
    %v1741 = vpop.permute.xlu0 %1740
    %1742 = vrot.lane.b32.xlu0 %v1736, 32
    %v1743 = vpop.permute.xlu0 %1742
    %v1744 = vmul.f32 %v1739, %v1652
    %v1745 = vmul.f32 %v1736, %v1741
    %v1746 = vadd.f32 %v1744, %v1745
    %v1747 = vtanh.pop %v1746
    %v1748 = vmul.f32 %v1743, %v1747
    %1749 = vst.msk [vmem:[#allocation3 + $0xc] sm:$0x3] %vm325, %v1748
    %v1750 = vld [vmem:[#allocation2 + $0xe] sm:$0x3]
    %v1752 = vsel %vm230, %v1748, 0
    %1754 = vmatprep.subr.mxu0 0.0
    %1755 = vmatpush1.msra.mxu0 %v1083
    %1756 = vmatprep.subr.mxu0 0.0
    %1757 = vmatpush1.msra.mxu0 %v1084
    %1758 = vmatprep.subr.mxu0 0.0
    %1759 = vmatpush1.msra.mxu0 %v1085
    %1760 = vmatprep.subr.mxu0 0.0
    %1761 = vmatpush1.msra.mxu0 %v1086
    %1762 = vmatprep.subr.mxu0 0.0
    %1763 = vmatpush1.msra.mxu0 0.0
    %1764 = vmatprep.subr.mxu0 0.0
    %1765 = vmatpush1.msra.mxu0 0.0
    %1766 = vmatprep.subr.mxu0 0.0
    %1767 = vmatpush1.msra.mxu0 0.0
    %1768 = vmatprep.subr.mxu0 0.0
    %1769 = vmatpush1.msra.mxu0 0.0
    %1770 = vmatprep.subr.mxu0 0.0
    %1771 = vmatpush1.msra.mxu0 0.0
    %1772 = vmatprep.subr.mxu0 0.0
    %1773 = vmatpush1.msra.mxu0 0.0
    %1774 = vmatprep.subr.mxu0 0.0
    %1775 = vmatpush1.msra.mxu0 0.0
    %1776 = vmatprep.subr.mxu0 0.0
    %1777 = vmatpush1.msra.mxu0 0.0
    %1778 = vmatprep.subr.mxu0 0.0
    %1779 = vmatpush1.msra.mxu0 0.0
    %1780 = vmatprep.subr.mxu0 0.0
    %1781 = vmatpush1.msra.mxu0 0.0
    %1782 = vmatprep.subr.mxu0 0.0
    %1783 = vmatpush1.msra.mxu0 0.0
    %1784 = vmatprep.subr.mxu0 0.0
    %1785 = vmatpush1.msra.mxu0 0.0
    %1786 = vmatprep.subr.mxu0 0.0
    %1787 = vmatpush1.msra.mxu0 0.0
    %1788 = vmatprep.subr.mxu0 0.0
    %1789 = vmatpush1.msra.mxu0 0.0
    %1790 = vmatprep.subr.mxu0 0.0
    %1791 = vmatpush1.msra.mxu0 0.0
    %1792 = vmatprep.subr.mxu0 0.0
    %1793 = vmatpush1.msra.mxu0 0.0
    %1794 = vmatprep.subr.mxu0 0.0
    %1795 = vmatpush1.msra.mxu0 0.0
    %1796 = vmatprep.subr.mxu0 0.0
    %1797 = vmatpush1.msra.mxu0 0.0
    %1798 = vmatprep.subr.mxu0 0.0
    %1799 = vmatpush1.msra.mxu0 0.0
    %1800 = vmatprep.subr.mxu0 0.0
    %1801 = vmatpush1.msra.mxu0 0.0
    %1802 = vmatprep.subr.mxu0 0.0
    %1803 = vmatpush1.msra.mxu0 0.0
    %1804 = vmatprep.subr.mxu0 0.0
    %1805 = vmatpush1.msra.mxu0 0.0
    %1806 = vmatprep.subr.mxu0 0.0
    %1807 = vmatpush1.msra.mxu0 0.0
    %1808 = vmatprep.subr.mxu0 0.0
    %1809 = vmatpush1.msra.mxu0 0.0
    %1810 = vmatprep.subr.mxu0 0.0
    %1811 = vmatpush1.msra.mxu0 0.0
    %1812 = vmatprep.subr.mxu0 0.0
    %1813 = vmatpush1.msra.mxu0 0.0
    %1814 = vmatprep.subr.mxu0 0.0
    %1815 = vmatpush1.msra.mxu0 0.0
    %1816 = vmatprep.subr.mxu0 0.0
    %1817 = vmatpush1.msra.mxu0 0.0
    %1818 = vmatprep.mubr.f32.mxu0 0.0
    %1819 = vmatmul.mubr.f32.gmra.mrb[0].mxu0 %v1752
    %v1820 = vpop.f32.mrb[0].mxu0
    %v1821 = vadd.f32 0.0, %v1820
    %v1822 = vpop.f32.mrb[0].mxu0
    %1823 = vdwg.mxu0
    %v1824 = vadd.f32 %v1750, %v1821
    %v1825 = vxor.u32 %v1824, 2147483648
    %v1826 = vmul.f32 %v1825, 1.442695
    %v1827 = vpow.pop %v1826
    %v1828 = vadd.f32 %v1827, 1.0
    %v1829 = vrcp.pop %v1828
    %v1830 = vmul.f32 1.0, %v1829
    %v1831 = vtanh.pop %v1824
    %1832 = vrot.lane.b32.xlu0 %v1830, 96
    %v1833 = vpop.permute.xlu0 %1832
    %1834 = vrot.lane.b32.xlu0 %v1831, 64
    %v1835 = vpop.permute.xlu0 %1834
    %1836 = vrot.lane.b32.xlu0 %v1830, 32
    %v1837 = vpop.permute.xlu0 %1836
    %v1838 = vmul.f32 %v1833, %v1746
    %v1839 = vmul.f32 %v1830, %v1835
    %v1840 = vadd.f32 %v1838, %v1839
    %v1841 = vtanh.pop %v1840
    %v1842 = vmul.f32 %v1837, %v1841
    %1843 = vst.msk [vmem:[#allocation3 + $0xe] sm:$0x3] %vm325, %v1842
    %s1844 = scalar_lea.vmem [#allocation10], 2
    %1845 = vst.msk [vmem:[%s1844] sm:$0x3] %vm325, %v1842
    %s1846 = scalar_lea.vmem [#allocation11], 2
    %1847 = vst.msk [vmem:[%s1846] sm:$0x3] %vm325, %v1840
    %v1848 = vld [vmem:[#allocation3] sm:$0xff]
    %v1849 = vld [vmem:[#allocation3 + $0x8] sm:$0xff]
    %v1850 = vld [vmem:[%s9] sm:$0xff]
    %v1851 = vld [vmem:[%s9 + $0x8] sm:$0xff]
    %v1852 = vld [vmem:[%s9 + $0x10] sm:$0xff]
    %v1853 = vld [vmem:[%s9 + $0x18] sm:$0xff]
    %v1854 = vld [vmem:[%s10] sm:$0x1]
    %v1856 = vlaneseq
    %v1857 = vshrl.u32 %v1856, 7
    %v1858 = vsub.s32 0, %v1857
    %v1859 = vrot.slane %v1854, %v1858
    %v1862 = vsel %vm230, %v1848, 0
    %v1865 = vsel %vm230, %v1849, 0
    %1867 = vmatprep.subr.mxu0 0.0
    %1868 = vmatpush1.msra.mxu0 %v1850
    %1869 = vmatprep.subr.mxu0 0.0
    %1870 = vmatpush1.msra.mxu0 %v1851
    %1871 = vmatprep.subr.mxu0 0.0
    %1872 = vmatpush1.msra.mxu0 %v1852
    %1873 = vmatprep.subr.mxu0 0.0
    %1874 = vmatpush1.msra.mxu0 %v1853
    %1875 = vmatprep.subr.mxu0 0.0
    %1876 = vmatpush1.msra.mxu0 0.0
    %1877 = vmatprep.subr.mxu0 0.0
    %1878 = vmatpush1.msra.mxu0 0.0
    %1879 = vmatprep.subr.mxu0 0.0
    %1880 = vmatpush1.msra.mxu0 0.0
    %1881 = vmatprep.subr.mxu0 0.0
    %1882 = vmatpush1.msra.mxu0 0.0
    %1883 = vmatprep.subr.mxu0 0.0
    %1884 = vmatpush1.msra.mxu0 0.0
    %1885 = vmatprep.subr.mxu0 0.0
    %1886 = vmatpush1.msra.mxu0 0.0
    %1887 = vmatprep.subr.mxu0 0.0
    %1888 = vmatpush1.msra.mxu0 0.0
    %1889 = vmatprep.subr.mxu0 0.0
    %1890 = vmatpush1.msra.mxu0 0.0
    %1891 = vmatprep.subr.mxu0 0.0
    %1892 = vmatpush1.msra.mxu0 0.0
    %1893 = vmatprep.subr.mxu0 0.0
    %1894 = vmatpush1.msra.mxu0 0.0
    %1895 = vmatprep.subr.mxu0 0.0
    %1896 = vmatpush1.msra.mxu0 0.0
    %1897 = vmatprep.subr.mxu0 0.0
    %1898 = vmatpush1.msra.mxu0 0.0
    %1899 = vmatprep.subr.mxu0 0.0
    %1900 = vmatpush1.msra.mxu0 0.0
    %1901 = vmatprep.subr.mxu0 0.0
    %1902 = vmatpush1.msra.mxu0 0.0
    %1903 = vmatprep.subr.mxu0 0.0
    %1904 = vmatpush1.msra.mxu0 0.0
    %1905 = vmatprep.subr.mxu0 0.0
    %1906 = vmatpush1.msra.mxu0 0.0
    %1907 = vmatprep.subr.mxu0 0.0
    %1908 = vmatpush1.msra.mxu0 0.0
    %1909 = vmatprep.subr.mxu0 0.0
    %1910 = vmatpush1.msra.mxu0 0.0
    %1911 = vmatprep.subr.mxu0 0.0
    %1912 = vmatpush1.msra.mxu0 0.0
    %1913 = vmatprep.subr.mxu0 0.0
    %1914 = vmatpush1.msra.mxu0 0.0
    %1915 = vmatprep.subr.mxu0 0.0
    %1916 = vmatpush1.msra.mxu0 0.0
    %1917 = vmatprep.subr.mxu0 0.0
    %1918 = vmatpush1.msra.mxu0 0.0
    %1919 = vmatprep.subr.mxu0 0.0
    %1920 = vmatpush1.msra.mxu0 0.0
    %1921 = vmatprep.subr.mxu0 0.0
    %1922 = vmatpush1.msra.mxu0 0.0
    %1923 = vmatprep.subr.mxu0 0.0
    %1924 = vmatpush1.msra.mxu0 0.0
    %1925 = vmatprep.subr.mxu0 0.0
    %1926 = vmatpush1.msra.mxu0 0.0
    %1927 = vmatprep.subr.mxu0 0.0
    %1928 = vmatpush1.msra.mxu0 0.0
    %1929 = vmatprep.subr.mxu0 0.0
    %1930 = vmatpush1.msra.mxu0 0.0
    %1931 = vmatprep.mubr.f32.mxu0 0.0
    %1932 = vmatmul.mubr.f32.gmra.mrb[0].mxu0 %v1862
    %v1933 = vpop.f32.mrb[0].mxu0
    %v1934 = vadd.f32 %v1859, %v1933
    %v1935 = vpop.f32.mrb[0].mxu0
    %1936 = vmatprep.mubr.f32.mxu0 0.0
    %1937 = vmatmul.mubr.f32.gmra.mrb[0].mxu0 %v1865
    %v1938 = vpop.f32.mrb[0].mxu0
    %v1939 = vadd.f32 %v1859, %v1938
    %v1940 = vpop.f32.mrb[0].mxu0
    %1941 = vdwg.mxu0
    %v1944 = vunpack.c.l.s4 1966171168
    %v1945 = vunpack.c.0.s8 %v1944
    %v1946 = vlaneseq
    %v1947 = vshrl.u32 %v1946, 7
    %v1948 = vsub.s32 %v1945, %v1947
    %v1949 = vrot.slane %v1934, %v1948
    %v1950 = vcombine.high %v1949, %v1949
    %v1952 = vunpack.c.l.s4 1966171168
    %v1953 = vunpack.c.0.s8 %v1952
    %v1954 = vlaneseq
    %v1955 = vshrl.u32 %v1954, 7
    %v1956 = vsub.s32 %v1953, %v1955
    %v1957 = vrot.slane %v1949, %v1956
    %v1959 = vunpack.c.l.s4 1966171168
    %v1960 = vunpack.c.0.s8 %v1959
    %v1961 = vlaneseq
    %v1962 = vshrl.u32 %v1961, 7
    %v1963 = vsub.s32 %v1960, %v1962
    %v1964 = vrot.slane %v1950, %v1963
    %v1967 = vcombine.high %v1957, %v1957
    %v1968 = vcombine.high %v1964, %v1964
    %v1969 = vcombine.high %v1934, %v1934
    %v1971 = vunpack.c.l.s4 1966171168
    %v1972 = vunpack.c.0.s8 %v1971
    %v1973 = vlaneseq
    %v1974 = vshrl.u32 %v1973, 7
    %v1975 = vsub.s32 %v1972, %v1974
    %v1976 = vrot.slane %v1969, %v1975
    %v1977 = vcombine.high %v1976, %v1976
    %v1979 = vunpack.c.l.s4 1966171168
    %v1980 = vunpack.c.0.s8 %v1979
    %v1981 = vlaneseq
    %v1982 = vshrl.u32 %v1981, 7
    %v1983 = vsub.s32 %v1980, %v1982
    %v1984 = vrot.slane %v1976, %v1983
    %v1986 = vunpack.c.l.s4 1966171168
    %v1987 = vunpack.c.0.s8 %v1986
    %v1988 = vlaneseq
    %v1989 = vshrl.u32 %v1988, 7
    %v1990 = vsub.s32 %v1987, %v1989
    %v1991 = vrot.slane %v1977, %v1990
    %v1992 = vcombine.high %v1984, %v1984
    %v1993 = vcombine.high %v1991, %v1991
    %v1996 = vunpack.c.l.s4 1966171168
    %v1997 = vunpack.c.0.s8 %v1996
    %v1998 = vlaneseq
    %v1999 = vshrl.u32 %v1998, 7
    %v2000 = vsub.s32 %v1997, %v1999
    %v2001 = vrot.slane %v1939, %v2000
    %v2002 = vcombine.high %v2001, %v2001
    %v2004 = vunpack.c.l.s4 1966171168
    %v2005 = vunpack.c.0.s8 %v2004
    %v2006 = vlaneseq
    %v2007 = vshrl.u32 %v2006, 7
    %v2008 = vsub.s32 %v2005, %v2007
    %v2009 = vrot.slane %v2001, %v2008
    %v2011 = vunpack.c.l.s4 1966171168
    %v2012 = vunpack.c.0.s8 %v2011
    %v2013 = vlaneseq
    %v2014 = vshrl.u32 %v2013, 7
    %v2015 = vsub.s32 %v2012, %v2014
    %v2016 = vrot.slane %v2002, %v2015
    %v2017 = vcombine.high %v2009, %v2009
    %v2018 = vcombine.high %v2016, %v2016
    %v2019 = vcombine.high %v1939, %v1939
    %v2021 = vunpack.c.l.s4 1966171168
    %v2022 = vunpack.c.0.s8 %v2021
    %v2023 = vlaneseq
    %v2024 = vshrl.u32 %v2023, 7
    %v2025 = vsub.s32 %v2022, %v2024
    %v2026 = vrot.slane %v2019, %v2025
    %v2027 = vcombine.high %v2026, %v2026
    %v2029 = vunpack.c.l.s4 1966171168
    %v2030 = vunpack.c.0.s8 %v2029
    %v2031 = vlaneseq
    %v2032 = vshrl.u32 %v2031, 7
    %v2033 = vsub.s32 %v2030, %v2032
    %v2034 = vrot.slane %v2026, %v2033
    %v2036 = vunpack.c.l.s4 1966171168
    %v2037 = vunpack.c.0.s8 %v2036
    %v2038 = vlaneseq
    %v2039 = vshrl.u32 %v2038, 7
    %v2040 = vsub.s32 %v2037, %v2039
    %v2041 = vrot.slane %v2027, %v2040
    %v2042 = vcombine.high %v2034, %v2034
    %v2043 = vcombine.high %v2041, %v2041
    %v2044 = vlaneseq
    %v2045 = vshrl.u32 %v2044, 7
    %v2046 = vsub.s32 0, %v2045
    %v2047 = vrot.slane %v1967, %v2046
    %v2048 = vlaneseq
    %v2049 = vshrl.u32 %v2048, 7
    %v2050 = vsub.s32 0, %v2049
    %v2051 = vrot.slane %v1968, %v2050
    %v2054 = vlaneseq
    %v2055 = vshrl.u32 %v2054, 7
    %v2056 = vsub.s32 0, %v2055
    %v2057 = vrot.slane %v1984, %v2056
    %v2058 = vlaneseq
    %v2059 = vshrl.u32 %v2058, 7
    %v2060 = vsub.s32 0, %v2059
    %v2061 = vrot.slane %v1991, %v2060
    %v2064 = vlaneseq
    %v2065 = vshrl.u32 %v2064, 7
    %v2066 = vsub.s32 0, %v2065
    %v2067 = vrot.slane %v1992, %v2066
    %v2068 = vlaneseq
    %v2069 = vshrl.u32 %v2068, 7
    %v2070 = vsub.s32 0, %v2069
    %v2071 = vrot.slane %v1993, %v2070
    %v2074 = vlaneseq
    %v2075 = vshrl.u32 %v2074, 7
    %v2076 = vsub.s32 0, %v2075
    %v2077 = vrot.slane %v2009, %v2076
    %v2078 = vlaneseq
    %v2079 = vshrl.u32 %v2078, 7
    %v2080 = vsub.s32 0, %v2079
    %v2081 = vrot.slane %v2016, %v2080
    %v2084 = vlaneseq
    %v2085 = vshrl.u32 %v2084, 7
    %v2086 = vsub.s32 0, %v2085
    %v2087 = vrot.slane %v2017, %v2086
    %v2088 = vlaneseq
    %v2089 = vshrl.u32 %v2088, 7
    %v2090 = vsub.s32 0, %v2089
    %v2091 = vrot.slane %v2018, %v2090
    %v2094 = vlaneseq
    %v2095 = vshrl.u32 %v2094, 7
    %v2096 = vsub.s32 0, %v2095
    %v2097 = vrot.slane %v2034, %v2096
    %v2098 = vlaneseq
    %v2099 = vshrl.u32 %v2098, 7
    %v2100 = vsub.s32 0, %v2099
    %v2101 = vrot.slane %v2041, %v2100
    %v2104 = vlaneseq
    %v2105 = vshrl.u32 %v2104, 7
    %v2106 = vsub.s32 0, %v2105
    %v2107 = vrot.slane %v2042, %v2106
    %v2108 = vlaneseq
    %v2109 = vshrl.u32 %v2108, 7
    %v2110 = vsub.s32 0, %v2109
    %v2111 = vrot.slane %v2043, %v2110
    %vm2114 = vcmask 1040384
    %v2115 = vsel %vm2114, %v1957, %v2047
    %v2116 = vsel %vm2114, %v1964, %v2051
    %v2117 = vsel %vm122, %v2115, %v2057
    %v2118 = vsel %vm122, %v2116, %v2061
    %vm2119 = vcmask 1042432
    %v2120 = vsel %vm2119, %v2117, %v2067
    %v2121 = vsel %vm2119, %v2118, %v2071
    %v2122 = vsel %vm124, %v2120, %v2077
    %v2123 = vsel %vm124, %v2121, %v2081
    %vm2124 = vcmask 1044480
    %v2125 = vsel %vm2124, %v2122, %v2087
    %v2126 = vsel %vm2124, %v2123, %v2091
    %v2127 = vsel %vm126, %v2125, %v2097
    %v2128 = vsel %vm126, %v2126, %v2101
    %vm2129 = vcmask 1046528
    %v2130 = vsel %vm2129, %v2127, %v2107
    %v2131 = vsel %vm2129, %v2128, %v2111
    %vm2132 = vcmask 31744
    %2133 = vst.msk [vmem:[%s11] sm:$0xff] %vm2132, %v2130
    %2134 = vst.msk [vmem:[%s11 + $0x8] sm:$0xff] %vm2132, %v2131
    // Predicated region
    $region58: #{net_forward.1} parent=1 // pred_check
      _
    $region59: #{net_forward.1} parent=1 // pred_check_branch
      %2136 = sbr.rel (0) target = $region61
    $region60: #{net_forward.1} parent=1 // pred_region
      _
    $region61: #{net_forward.1} parent=1 // pred_fallthru
      _
    // Predicated region
    $region62: #{net_forward.1} parent=1 // pred_check
      _
    $region63: #{net_forward.1} parent=1 // pred_check_branch
      %2138 = sbr.rel (0) target = $region65
    $region64: #{net_forward.1} parent=1 // pred_region
      %s2140 = ssub.s32 64, 64
      %2141 = vsyncadd [#allocation6], %s2140
      %s2142 = sshll.u32 [#allocation10], 4
      %s2143 = int_to_ptr.vmem [resolvable:$true] %s2142
      %2148 = dma.vmem_to_hbm [thread:$0]  %s2143, 64, %s12, [#allocation6], 32, 32, 2
    $region65: #{net_forward.1} parent=1 // pred_fallthru
      _
    // Predicated region
    $region66: #{net_forward.1} parent=1 // pred_check
      _
    $region67: #{net_forward.1} parent=1 // pred_check_branch
      %2150 = sbr.rel (0) target = $region69
    $region68: #{net_forward.1} parent=1 // pred_region
      %s2152 = ssub.s32 64, 64
      %2153 = vsyncadd [#allocation12], %s2152
      %s2154 = sshll.u32 [#allocation11], 4
      %s2155 = int_to_ptr.vmem [resolvable:$true] %s2154
      %2160 = dma.vmem_to_hbm [thread:$0]  %s2155, 64, %s13, [#allocation12], 32, 32, 2
    $region69: #{net_forward.1} parent=1 // pred_fallthru
      _
    // Predicated region
    $region70: #{net_forward.1} parent=1 // pred_check
      _
    $region71: #{net_forward.1} parent=1 // pred_check_branch
      %2162 = sbr.rel (0) target = $region73
    $region72: #{net_forward.1} parent=1 // pred_region
      _
    $region73: #{net_forward.1} parent=1 // pred_fallthru
      _
    // Predicated region
    $region74: #{net_forward.1} parent=1 // pred_check
      _
    $region75: #{net_forward.1} parent=1 // pred_check_branch
      %2164 = sbr.rel (0) target = $region77
    $region76: #{net_forward.1} parent=1 // pred_region
      %2165 = dma.done [#allocation6], 64
    $region77: #{net_forward.1} parent=1 // pred_fallthru
      _
    // Predicated region
    $region78: #{net_forward.1} parent=1 // pred_check
      _
    $region79: #{net_forward.1} parent=1 // pred_check_branch
      %2167 = sbr.rel (0) target = $region81
    $region80: #{net_forward.1} parent=1 // pred_region
      %2168 = dma.done [#allocation12], 64
    $region81: #{net_forward.1} parent=1 // pred_fallthru
      _
    %2169 = vsyncpa [#allocation5], 1
    %2170 = vsyncpa [#allocation8], 1
    %2171 = vsyncpa [#allocation6], 1
    %2172 = vsyncpa [#allocation12], 1

</llo_original>
